<compile_context>
chip_gen: v7x
topology: tpu7x:2x2x1
jax: 0.10.0
libtpu: 0.0.40
codegen_flags: <defaults>
</compile_context>

<pallas_src>
from functools import partial

import jax
import jax.numpy as jnp
from jax.experimental import pallas as pl
from jax.experimental.pallas import tpu as pltpu


def _attention_kernel(x_ref, wqkv_ref, wproj_ref, bproj_ref, o_ref,
                      k_scratch, v_scratch, ctx_scratch,
                      *, num_heads, head_dim, q_tile):
    """One (batch, q-tile) grid step of fused MHSA.

    x_ref      : (1, N, C)   input block (full sequence; re-DMA'd only when b changes)
    wqkv_ref   : (C, 3C)     bf16, q-columns pre-scaled by head_dim**-0.5
    wproj_ref  : (C, C)      bf16
    bproj_ref  : (1, C)      f32
    o_ref      : (1, tq, C)  output block (lane-dense, width C)
    k_scratch  : (N, C)      bf16  keys   (computed once per batch at qi == 0)
    v_scratch  : (N, C)      bf16  values (computed once per batch at qi == 0)
    ctx_scratch: (tq, C)     f32   merged per-head attention context
    """
    qi = pl.program_id(1)
    C = x_ref.shape[2]
    D = head_dim

    # ---- K / V projections: once per batch (q-tile axis is 'arbitrary') ----
    @pl.when(qi == 0)
    def _():
        x_full = x_ref[0].astype(jnp.bfloat16)                         # (N, C)
        k_scratch[...] = jnp.dot(x_full, wqkv_ref[:, C:2 * C],
                                 preferred_element_type=jnp.float32
                                 ).astype(jnp.bfloat16)
        v_scratch[...] = jnp.dot(x_full, wqkv_ref[:, 2 * C:3 * C],
                                 preferred_element_type=jnp.float32
                                 ).astype(jnp.bfloat16)

    # ---- Q projection for this q-tile (scale already folded into the weight) ----
    q_start = pl.multiple_of(qi * q_tile, q_tile)
    x_q = x_ref[0, pl.ds(q_start, q_tile), :].astype(jnp.bfloat16)     # (tq, C)
    q = jnp.dot(x_q, wqkv_ref[:, 0:C],
                preferred_element_type=jnp.float32).astype(jnp.bfloat16)  # (tq, C)

    # ---- per-head attention: contiguous lane slices, plain 2-D MXU dots ----
    # (head_dim < 256 under-fills the MXU contraction; accepted — the K=C
    #  projections are the MXU workhorses.)
    for h in range(num_heads):
        lo, hi = h * D, (h + 1) * D
        q_h = q[:, lo:hi]                      # (tq, D) bf16
        k_h = k_scratch[:, lo:hi]              # (N,  D) bf16
        v_h = v_scratch[:, lo:hi]              # (N,  D) bf16

        # s[n, m] = q_h[n, :] . k_h[m, :]  (contract last dims; no explicit transpose)
        s = jax.lax.dot_general(q_h, k_h, (((1,), (1,)), ((), ())),
                                preferred_element_type=jnp.float32)    # (tq, N)

        # numerically-stable softmax in f32 (keep VPU/EUP math f32 for v5e)
        s_max = jnp.max(s, axis=-1, keepdims=True)
        p = jnp.exp(s - s_max)
        inv = pl.reciprocal(jnp.sum(p, axis=-1, keepdims=True), approx=True)
        p = (p * inv).astype(jnp.bfloat16)
        # TODO(synk): attn_drop is nn.Dropout(0.0) -> identity; not emitted.

        ctx_scratch[:, lo:hi] = jnp.dot(p, v_h,
                                        preferred_element_type=jnp.float32)

    # ---- output projection (+ bias, loaded once per tile) ----
    bias = bproj_ref[...].astype(jnp.float32)                          # (1, C)
    out = jnp.dot(ctx_scratch[...].astype(jnp.bfloat16), wproj_ref[...],
                  preferred_element_type=jnp.float32) + bias
    # TODO(synk): proj_drop is nn.Dropout(0.0) -> identity; not emitted.
    o_ref[0] = out.astype(o_ref.dtype)


def attention_fuse(x, w_qkv, w_proj, b_proj, *, num_heads, q_tile=None):
    """x: (B, N, C). w_qkv: (C, 3C). w_proj: (C, C). b_proj: (C,)."""
    B, N, C = x.shape
    head_dim = C // num_heads
    scale = head_dim ** (-0.5)

    if q_tile is None:
        q_tile = 128 if (N % 128 == 0) else N
    assert N % q_tile == 0, "sequence length must be divisible by q_tile"
    num_q_tiles = N // q_tile

    # Fold the attention scale into the q-columns of w_qkv (zero in-kernel cost)
    # and hand the MXU bf16 operands (f32 accumulation happens in the kernel).
    w_qkv_scaled = w_qkv.astype(jnp.float32).at[:, :C].multiply(scale)
    w_qkv_bf16 = w_qkv_scaled.astype(jnp.bfloat16)
    w_proj_bf16 = w_proj.astype(jnp.bfloat16)
    b_proj_2d = b_proj.astype(jnp.float32).reshape(1, C)

    kernel = partial(_attention_kernel, num_heads=num_heads,
                     head_dim=head_dim, q_tile=q_tile)

    return pl.pallas_call(
        kernel,
        out_shape=jax.ShapeDtypeStruct((B, N, C), x.dtype),
        grid_spec=pltpu.PrefetchScalarGridSpec(
            num_scalar_prefetch=0,
            grid=(B, num_q_tiles),
            in_specs=[
                pl.BlockSpec((1, N, C), lambda b, qi: (b, 0, 0)),     # x (full seq; DMA only when b changes)
                pl.BlockSpec((C, 3 * C), lambda b, qi: (0, 0)),       # qkv weight (resident, bf16)
                pl.BlockSpec((C, C), lambda b, qi: (0, 0)),           # proj weight (resident, bf16)
                pl.BlockSpec((1, C), lambda b, qi: (0, 0)),           # proj bias
            ],
            out_specs=pl.BlockSpec((1, q_tile, C), lambda b, qi: (b, qi, 0)),
            scratch_shapes=[
                pltpu.VMEM((N, C), jnp.bfloat16),       # K (persists across q-tiles)
                pltpu.VMEM((N, C), jnp.bfloat16),       # V (persists across q-tiles)
                pltpu.VMEM((q_tile, C), jnp.float32),   # merged head context
            ],
        ),
        compiler_params=pltpu.CompilerParams(
            # K/V scratch carries across the q-tile axis -> it must be 'arbitrary'.
            dimension_semantics=("parallel", "arbitrary"),
            vmem_limit_bytes=64 * 1024 * 1024,          # explicit budget (v7x: 64 MiB physical)
        ),
    )(x, w_qkv_bf16, w_proj_bf16, b_proj_2d)


def attention_fuse_ref(x, w_qkv, w_proj, b_proj, *, num_heads):
    """Plain-JAX f32 reference mirroring the PyTorch forward exactly."""
    B, N, C = x.shape
    head_dim = C // num_heads
    scale = head_dim ** (-0.5)
    qkv = x @ w_qkv                                               # (B, N, 3C)
    qkv = qkv.reshape(B, N, 3, num_heads, head_dim)
    qkv = jnp.transpose(qkv, (2, 0, 3, 1, 4))                     # (3, B, H, N, D)
    q, k, v = qkv[0], qkv[1], qkv[2]
    attn = (q @ jnp.swapaxes(k, -2, -1)) * scale                  # (B, H, N, N)
    attn = jax.nn.softmax(attn, axis=-1)
    out = attn @ v                                                # (B, H, N, D)
    out = jnp.transpose(out, (0, 2, 1, 3)).reshape(B, N, C)
    return out @ w_proj + b_proj


if __name__ == "__main__":
    # Small shapes consistent with the module: dim divisible by num_heads=6.
    B, N, C = 2, 8, 24
    num_heads = 6

    key = jax.random.PRNGKey(0)
    kx, kqkv, kproj, kb = jax.random.split(key, 4)

    x = jax.random.normal(kx, (B, N, C), dtype=jnp.float32)
    # Deterministic synthetic parameters (qkv_bias=False as in the default ctor).
    w_qkv = jax.random.normal(kqkv, (C, 3 * C), dtype=jnp.float32) * (1.0 / (C ** 0.5))
    w_proj = jax.random.normal(kproj, (C, C), dtype=jnp.float32) * (1.0 / (C ** 0.5))
    b_proj = jax.random.normal(kb, (C,), dtype=jnp.float32) * 0.01

    out = attention_fuse(x, w_qkv, w_proj, b_proj, num_heads=num_heads)
    out = jax.block_until_ready(out)

    ref = attention_fuse_ref(x, w_qkv, w_proj, b_proj, num_heads=num_heads)
    assert out.shape == (B, N, C)
    # bf16 MXU inputs + approx reciprocal loosen numerics vs the all-f32 reference.
    max_err = float(jnp.max(jnp.abs(out - ref)))
    assert jnp.allclose(out, ref, atol=5e-2, rtol=5e-2), \
        f"mismatch vs reference (max abs err {max_err})"

    print("KERNEL_OK")
</pallas_src>

<mosaic_0001>
module attributes {stable_mosaic.version = 11 : i64} {
  func.func @_attention_kernel(%arg0: i32, %arg1: i32, %arg2: memref<1x8x24xf32, #tpu.memory_space<vmem>>, %arg3: memref<24x72xbf16, #tpu.memory_space<vmem>>, %arg4: memref<24x24xbf16, #tpu.memory_space<vmem>>, %arg5: memref<1x24xf32, #tpu.memory_space<vmem>>, %arg6: memref<1x8x24xf32, #tpu.memory_space<vmem>>, %arg7: memref<8x24xbf16, #tpu.memory_space<vmem>>, %arg8: memref<8x24xbf16, #tpu.memory_space<vmem>>, %arg9: memref<8x24xf32, #tpu.memory_space<vmem>>) attributes {dimension_semantics = [#tpu.dimension_semantics<parallel>, #tpu.dimension_semantics<arbitrary>], iteration_bounds = array<i64: 2, 1>, scalar_prefetch = 0 : i64, scratch_operands = 3 : i64, tpu.core_type = #tpu.core_type<tc>, window_params = [{transform_indices = @transform_0, window_bounds = array<i64: 1, 8, 24>}, {pipeline_mode = #tpu.pipeline_mode<synchronous>, transform_indices = @transform_1, window_bounds = array<i64: 24, 72>}, {pipeline_mode = #tpu.pipeline_mode<synchronous>, transform_indices = @transform_2, window_bounds = array<i64: 24, 24>}, {pipeline_mode = #tpu.pipeline_mode<synchronous>, transform_indices = @transform_3, window_bounds = array<i64: 1, 24>}, {transform_indices = @transform_4, window_bounds = array<i64: 1, 8, 24>}]} {
    %c0_i32 = arith.constant 0 : i32
    %0 = arith.cmpi eq, %arg1, %c0_i32 : i32
    %1 = arith.extui %0 : i1 to i32
    %c0_i32_0 = arith.constant 0 : i32
    %2 = arith.cmpi ne, %1, %c0_i32_0 : i32
    scf.if %2 {
      %c0_69 = arith.constant 0 : index
      %c0_70 = arith.constant 0 : index
      %c0_71 = arith.constant 0 : index
      %124 = vector.load %arg2[%c0_69, %c0_70, %c0_71] : memref<1x8x24xf32, #tpu.memory_space<vmem>>, vector<1x8x24xf32>
      %125 = vector.shape_cast %124 : vector<1x8x24xf32> to vector<8x24xf32>
      %126 = arith.truncf %125 : vector<8x24xf32> to vector<8x24xbf16>
      %c0_72 = arith.constant 0 : index
      %c24 = arith.constant 24 : index
      %127 = vector.load %arg3[%c0_72, %c24] : memref<24x72xbf16, #tpu.memory_space<vmem>>, vector<24x24xbf16>
      %cst_73 = arith.constant dense<0.000000e+00> : vector<8x24xf32>
      %128 = tpu.matmul %126, %127, %cst_73 {dimension_numbers = #tpu.dot_dimension_numbers<[1], [0], [0], [1], [0, 0, 1, 1], [], []>} : vector<8x24xbf16>, vector<24x24xbf16>, vector<8x24xf32> -> vector<8x24xf32>
      %129 = arith.truncf %128 : vector<8x24xf32> to vector<8x24xbf16>
      %c0_74 = arith.constant 0 : index
      %c0_75 = arith.constant 0 : index
      %130 = vector.load %arg7[%c0_74, %c0_75] : memref<8x24xbf16, #tpu.memory_space<vmem>>, vector<8x24xbf16>
      tpu.vector_store %arg7[%c0_74, %c0_75], %129 {strides = array<i32>} : memref<8x24xbf16, #tpu.memory_space<vmem>>, vector<8x24xbf16>,
      %c0_76 = arith.constant 0 : index
      %c48 = arith.constant 48 : index
      %131 = vector.load %arg3[%c0_76, %c48] : memref<24x72xbf16, #tpu.memory_space<vmem>>, vector<24x24xbf16>
      %cst_77 = arith.constant dense<0.000000e+00> : vector<8x24xf32>
      %132 = tpu.matmul %126, %131, %cst_77 {dimension_numbers = #tpu.dot_dimension_numbers<[1], [0], [0], [1], [0, 0, 1, 1], [], []>} : vector<8x24xbf16>, vector<24x24xbf16>, vector<8x24xf32> -> vector<8x24xf32>
      %133 = arith.truncf %132 : vector<8x24xf32> to vector<8x24xbf16>
      %c0_78 = arith.constant 0 : index
      %c0_79 = arith.constant 0 : index
      %134 = vector.load %arg8[%c0_78, %c0_79] : memref<8x24xbf16, #tpu.memory_space<vmem>>, vector<8x24xbf16>
      tpu.vector_store %arg8[%c0_78, %c0_79], %133 {strides = array<i32>} : memref<8x24xbf16, #tpu.memory_space<vmem>>, vector<8x24xbf16>,
    } else {
    }
    %c8_i32 = arith.constant 8 : i32
    %3 = arith.muli %arg1, %c8_i32 : i32
    %4 = tpu.assume_multiple %3, 8 : i32
    %c0 = arith.constant 0 : index
    %5 = arith.index_cast %4 : i32 to index
    %c0_1 = arith.constant 0 : index
    %6 = vector.load %arg2[%c0, %5, %c0_1] : memref<1x8x24xf32, #tpu.memory_space<vmem>>, vector<1x8x24xf32>
    %7 = vector.shape_cast %6 : vector<1x8x24xf32> to vector<8x24xf32>
    %8 = arith.truncf %7 : vector<8x24xf32> to vector<8x24xbf16>
    %c0_2 = arith.constant 0 : index
    %c0_3 = arith.constant 0 : index
    %9 = vector.load %arg3[%c0_2, %c0_3] : memref<24x72xbf16, #tpu.memory_space<vmem>>, vector<24x24xbf16>
    %cst = arith.constant dense<0.000000e+00> : vector<8x24xf32>
    %10 = tpu.matmul %8, %9, %cst {dimension_numbers = #tpu.dot_dimension_numbers<[1], [0], [0], [1], [0, 0, 1, 1], [], []>} : vector<8x24xbf16>, vector<24x24xbf16>, vector<8x24xf32> -> vector<8x24xf32>
    %11 = arith.truncf %10 : vector<8x24xf32> to vector<8x24xbf16>
    %12 = vector.extract_strided_slice %11 {offsets = [0, 0], sizes = [8, 4], strides = [1, 1]} : vector<8x24xbf16> to vector<8x4xbf16>
    %c0_4 = arith.constant 0 : index
    %c0_5 = arith.constant 0 : index
    %13 = vector.load %arg7[%c0_4, %c0_5] : memref<8x24xbf16, #tpu.memory_space<vmem>>, vector<8x4xbf16>
    %c0_6 = arith.constant 0 : index
    %c0_7 = arith.constant 0 : index
    %14 = vector.load %arg8[%c0_6, %c0_7] : memref<8x24xbf16, #tpu.memory_space<vmem>>, vector<8x4xbf16>
    %cst_8 = arith.constant dense<0.000000e+00> : vector<8x8xf32>
    %15 = tpu.matmul %12, %13, %cst_8 {dimension_numbers = #tpu.dot_dimension_numbers<[1], [1], [0], [0], [0, 0, 1, 0], [], []>} : vector<8x4xbf16>, vector<8x4xbf16>, vector<8x8xf32> -> vector<8x8xf32>
    %cst_9 = arith.constant dense<0xFF800000> : vector<8xf32>
    %16 = vector.multi_reduction <maximumf>, %15, %cst_9 [1] : vector<8x8xf32> to vector<8xf32>
    %17 = vector.shape_cast %16 : vector<8xf32> to vector<8x1xf32>
    %18 = vector.broadcast %17 : vector<8x1xf32> to vector<8x8xf32>
    %19 = arith.subf %15, %18 : vector<8x8xf32>
    %20 = math.exp %19 : vector<8x8xf32>
    %cst_10 = arith.constant dense<0.000000e+00> : vector<8xf32>
    %21 = vector.multi_reduction <add>, %20, %cst_10 [1] : vector<8x8xf32> to vector<8xf32>
    %22 = vector.shape_cast %21 : vector<8xf32> to vector<8x1xf32>
    %23 = tpu.reciprocal %22 {approx = true} : vector<8x1xf32> -> vector<8x1xf32>
    %24 = vector.broadcast %23 : vector<8x1xf32> to vector<8x8xf32>
    %25 = arith.mulf %20, %24 : vector<8x8xf32>
    %26 = arith.truncf %25 : vector<8x8xf32> to vector<8x8xbf16>
    %cst_11 = arith.constant dense<0.000000e+00> : vector<8x4xf32>
    %27 = tpu.matmul %26, %14, %cst_11 {dimension_numbers = #tpu.dot_dimension_numbers<[1], [0], [0], [1], [0, 0, 1, 1], [], []>} : vector<8x8xbf16>, vector<8x4xbf16>, vector<8x4xf32> -> vector<8x4xf32>
    %c0_12 = arith.constant 0 : index
    %c0_13 = arith.constant 0 : index
    %28 = vector.load %arg9[%c0_12, %c0_13] : memref<8x24xf32, #tpu.memory_space<vmem>>, vector<8x4xf32>
    tpu.vector_store %arg9[%c0_12, %c0_13], %27 {strides = array<i32>} : memref<8x24xf32, #tpu.memory_space<vmem>>, vector<8x4xf32>,
    %29 = vector.extract_strided_slice %11 {offsets = [0, 4], sizes = [8, 4], strides = [1, 1]} : vector<8x24xbf16> to vector<8x4xbf16>
    %c0_14 = arith.constant 0 : index
    %c4 = arith.constant 4 : index
    %30 = vector.load %arg7[%c0_14, %c4] : memref<8x24xbf16, #tpu.memory_space<vmem>>, vector<8x4xbf16>
    %c0_15 = arith.constant 0 : index
    %c4_16 = arith.constant 4 : index
    %31 = vector.load %arg8[%c0_15, %c4_16] : memref<8x24xbf16, #tpu.memory_space<vmem>>, vector<8x4xbf16>
    %cst_17 = arith.constant dense<0.000000e+00> : vector<8x8xf32>
    %32 = tpu.matmul %29, %30, %cst_17 {dimension_numbers = #tpu.dot_dimension_numbers<[1], [1], [0], [0], [0, 0, 1, 0], [], []>} : vector<8x4xbf16>, vector<8x4xbf16>, vector<8x8xf32> -> vector<8x8xf32>
    %cst_18 = arith.constant dense<0xFF800000> : vector<8xf32>
    %33 = vector.multi_reduction <maximumf>, %32, %cst_18 [1] : vector<8x8xf32> to vector<8xf32>
    %34 = vector.shape_cast %33 : vector<8xf32> to vector<8x1xf32>
    %35 = vector.broadcast %34 : vector<8x1xf32> to vector<8x8xf32>
    %36 = arith.subf %32, %35 : vector<8x8xf32>
    %37 = math.exp %36 : vector<8x8xf32>
    %cst_19 = arith.constant dense<0.000000e+00> : vector<8xf32>
    %38 = vector.multi_reduction <add>, %37, %cst_19 [1] : vector<8x8xf32> to vector<8xf32>
    %39 = vector.shape_cast %38 : vector<8xf32> to vector<8x1xf32>
    %40 = tpu.reciprocal %39 {approx = true} : vector<8x1xf32> -> vector<8x1xf32>
    %41 = vector.broadcast %40 : vector<8x1xf32> to vector<8x8xf32>
    %42 = arith.mulf %37, %41 : vector<8x8xf32>
    %43 = arith.truncf %42 : vector<8x8xf32> to vector<8x8xbf16>
    %cst_20 = arith.constant dense<0.000000e+00> : vector<8x4xf32>
    %44 = tpu.matmul %43, %31, %cst_20 {dimension_numbers = #tpu.dot_dimension_numbers<[1], [0], [0], [1], [0, 0, 1, 1], [], []>} : vector<8x8xbf16>, vector<8x4xbf16>, vector<8x4xf32> -> vector<8x4xf32>
    %c0_21 = arith.constant 0 : index
    %c4_22 = arith.constant 4 : index
    %45 = vector.load %arg9[%c0_21, %c4_22] : memref<8x24xf32, #tpu.memory_space<vmem>>, vector<8x4xf32>
    tpu.vector_store %arg9[%c0_21, %c4_22], %44 {strides = array<i32>} : memref<8x24xf32, #tpu.memory_space<vmem>>, vector<8x4xf32>,
    %46 = vector.extract_strided_slice %11 {offsets = [0, 8], sizes = [8, 4], strides = [1, 1]} : vector<8x24xbf16> to vector<8x4xbf16>
    %c0_23 = arith.constant 0 : index
    %c8 = arith.constant 8 : index
    %47 = vector.load %arg7[%c0_23, %c8] : memref<8x24xbf16, #tpu.memory_space<vmem>>, vector<8x4xbf16>
    %c0_24 = arith.constant 0 : index
    %c8_25 = arith.constant 8 : index
    %48 = vector.load %arg8[%c0_24, %c8_25] : memref<8x24xbf16, #tpu.memory_space<vmem>>, vector<8x4xbf16>
    %cst_26 = arith.constant dense<0.000000e+00> : vector<8x8xf32>
    %49 = tpu.matmul %46, %47, %cst_26 {dimension_numbers = #tpu.dot_dimension_numbers<[1], [1], [0], [0], [0, 0, 1, 0], [], []>} : vector<8x4xbf16>, vector<8x4xbf16>, vector<8x8xf32> -> vector<8x8xf32>
    %cst_27 = arith.constant dense<0xFF800000> : vector<8xf32>
    %50 = vector.multi_reduction <maximumf>, %49, %cst_27 [1] : vector<8x8xf32> to vector<8xf32>
    %51 = vector.shape_cast %50 : vector<8xf32> to vector<8x1xf32>
    %52 = vector.broadcast %51 : vector<8x1xf32> to vector<8x8xf32>
    %53 = arith.subf %49, %52 : vector<8x8xf32>
    %54 = math.exp %53 : vector<8x8xf32>
    %cst_28 = arith.constant dense<0.000000e+00> : vector<8xf32>
    %55 = vector.multi_reduction <add>, %54, %cst_28 [1] : vector<8x8xf32> to vector<8xf32>
    %56 = vector.shape_cast %55 : vector<8xf32> to vector<8x1xf32>
    %57 = tpu.reciprocal %56 {approx = true} : vector<8x1xf32> -> vector<8x1xf32>
    %58 = vector.broadcast %57 : vector<8x1xf32> to vector<8x8xf32>
    %59 = arith.mulf %54, %58 : vector<8x8xf32>
    %60 = arith.truncf %59 : vector<8x8xf32> to vector<8x8xbf16>
    %cst_29 = arith.constant dense<0.000000e+00> : vector<8x4xf32>
    %61 = tpu.matmul %60, %48, %cst_29 {dimension_numbers = #tpu.dot_dimension_numbers<[1], [0], [0], [1], [0, 0, 1, 1], [], []>} : vector<8x8xbf16>, vector<8x4xbf16>, vector<8x4xf32> -> vector<8x4xf32>
    %c0_30 = arith.constant 0 : index
    %c8_31 = arith.constant 8 : index
    %62 = vector.load %arg9[%c0_30, %c8_31] : memref<8x24xf32, #tpu.memory_space<vmem>>, vector<8x4xf32>
    tpu.vector_store %arg9[%c0_30, %c8_31], %61 {strides = array<i32>} : memref<8x24xf32, #tpu.memory_space<vmem>>, vector<8x4xf32>,
    %63 = vector.extract_strided_slice %11 {offsets = [0, 12], sizes = [8, 4], strides = [1, 1]} : vector<8x24xbf16> to vector<8x4xbf16>
    %c0_32 = arith.constant 0 : index
    %c12 = arith.constant 12 : index
    %64 = vector.load %arg7[%c0_32, %c12] : memref<8x24xbf16, #tpu.memory_space<vmem>>, vector<8x4xbf16>
    %c0_33 = arith.constant 0 : index
    %c12_34 = arith.constant 12 : index
    %65 = vector.load %arg8[%c0_33, %c12_34] : memref<8x24xbf16, #tpu.memory_space<vmem>>, vector<8x4xbf16>
    %cst_35 = arith.constant dense<0.000000e+00> : vector<8x8xf32>
    %66 = tpu.matmul %63, %64, %cst_35 {dimension_numbers = #tpu.dot_dimension_numbers<[1], [1], [0], [0], [0, 0, 1, 0], [], []>} : vector<8x4xbf16>, vector<8x4xbf16>, vector<8x8xf32> -> vector<8x8xf32>
    %cst_36 = arith.constant dense<0xFF800000> : vector<8xf32>
    %67 = vector.multi_reduction <maximumf>, %66, %cst_36 [1] : vector<8x8xf32> to vector<8xf32>
    %68 = vector.shape_cast %67 : vector<8xf32> to vector<8x1xf32>
    %69 = vector.broadcast %68 : vector<8x1xf32> to vector<8x8xf32>
    %70 = arith.subf %66, %69 : vector<8x8xf32>
    %71 = math.exp %70 : vector<8x8xf32>
    %cst_37 = arith.constant dense<0.000000e+00> : vector<8xf32>
    %72 = vector.multi_reduction <add>, %71, %cst_37 [1] : vector<8x8xf32> to vector<8xf32>
    %73 = vector.shape_cast %72 : vector<8xf32> to vector<8x1xf32>
    %74 = tpu.reciprocal %73 {approx = true} : vector<8x1xf32> -> vector<8x1xf32>
    %75 = vector.broadcast %74 : vector<8x1xf32> to vector<8x8xf32>
    %76 = arith.mulf %71, %75 : vector<8x8xf32>
    %77 = arith.truncf %76 : vector<8x8xf32> to vector<8x8xbf16>
    %cst_38 = arith.constant dense<0.000000e+00> : vector<8x4xf32>
    %78 = tpu.matmul %77, %65, %cst_38 {dimension_numbers = #tpu.dot_dimension_numbers<[1], [0], [0], [1], [0, 0, 1, 1], [], []>} : vector<8x8xbf16>, vector<8x4xbf16>, vector<8x4xf32> -> vector<8x4xf32>
    %c0_39 = arith.constant 0 : index
    %c12_40 = arith.constant 12 : index
    %79 = vector.load %arg9[%c0_39, %c12_40] : memref<8x24xf32, #tpu.memory_space<vmem>>, vector<8x4xf32>
    tpu.vector_store %arg9[%c0_39, %c12_40], %78 {strides = array<i32>} : memref<8x24xf32, #tpu.memory_space<vmem>>, vector<8x4xf32>,
    %80 = vector.extract_strided_slice %11 {offsets = [0, 16], sizes = [8, 4], strides = [1, 1]} : vector<8x24xbf16> to vector<8x4xbf16>
    %c0_41 = arith.constant 0 : index
    %c16 = arith.constant 16 : index
    %81 = vector.load %arg7[%c0_41, %c16] : memref<8x24xbf16, #tpu.memory_space<vmem>>, vector<8x4xbf16>
    %c0_42 = arith.constant 0 : index
    %c16_43 = arith.constant 16 : index
    %82 = vector.load %arg8[%c0_42, %c16_43] : memref<8x24xbf16, #tpu.memory_space<vmem>>, vector<8x4xbf16>
    %cst_44 = arith.constant dense<0.000000e+00> : vector<8x8xf32>
    %83 = tpu.matmul %80, %81, %cst_44 {dimension_numbers = #tpu.dot_dimension_numbers<[1], [1], [0], [0], [0, 0, 1, 0], [], []>} : vector<8x4xbf16>, vector<8x4xbf16>, vector<8x8xf32> -> vector<8x8xf32>
    %cst_45 = arith.constant dense<0xFF800000> : vector<8xf32>
    %84 = vector.multi_reduction <maximumf>, %83, %cst_45 [1] : vector<8x8xf32> to vector<8xf32>
    %85 = vector.shape_cast %84 : vector<8xf32> to vector<8x1xf32>
    %86 = vector.broadcast %85 : vector<8x1xf32> to vector<8x8xf32>
    %87 = arith.subf %83, %86 : vector<8x8xf32>
    %88 = math.exp %87 : vector<8x8xf32>
    %cst_46 = arith.constant dense<0.000000e+00> : vector<8xf32>
    %89 = vector.multi_reduction <add>, %88, %cst_46 [1] : vector<8x8xf32> to vector<8xf32>
    %90 = vector.shape_cast %89 : vector<8xf32> to vector<8x1xf32>
    %91 = tpu.reciprocal %90 {approx = true} : vector<8x1xf32> -> vector<8x1xf32>
    %92 = vector.broadcast %91 : vector<8x1xf32> to vector<8x8xf32>
    %93 = arith.mulf %88, %92 : vector<8x8xf32>
    %94 = arith.truncf %93 : vector<8x8xf32> to vector<8x8xbf16>
    %cst_47 = arith.constant dense<0.000000e+00> : vector<8x4xf32>
    %95 = tpu.matmul %94, %82, %cst_47 {dimension_numbers = #tpu.dot_dimension_numbers<[1], [0], [0], [1], [0, 0, 1, 1], [], []>} : vector<8x8xbf16>, vector<8x4xbf16>, vector<8x4xf32> -> vector<8x4xf32>
    %c0_48 = arith.constant 0 : index
    %c16_49 = arith.constant 16 : index
    %96 = vector.load %arg9[%c0_48, %c16_49] : memref<8x24xf32, #tpu.memory_space<vmem>>, vector<8x4xf32>
    tpu.vector_store %arg9[%c0_48, %c16_49], %95 {strides = array<i32>} : memref<8x24xf32, #tpu.memory_space<vmem>>, vector<8x4xf32>,
    %97 = vector.extract_strided_slice %11 {offsets = [0, 20], sizes = [8, 4], strides = [1, 1]} : vector<8x24xbf16> to vector<8x4xbf16>
    %c0_50 = arith.constant 0 : index
    %c20 = arith.constant 20 : index
    %98 = vector.load %arg7[%c0_50, %c20] : memref<8x24xbf16, #tpu.memory_space<vmem>>, vector<8x4xbf16>
    %c0_51 = arith.constant 0 : index
    %c20_52 = arith.constant 20 : index
    %99 = vector.load %arg8[%c0_51, %c20_52] : memref<8x24xbf16, #tpu.memory_space<vmem>>, vector<8x4xbf16>
    %cst_53 = arith.constant dense<0.000000e+00> : vector<8x8xf32>
    %100 = tpu.matmul %97, %98, %cst_53 {dimension_numbers = #tpu.dot_dimension_numbers<[1], [1], [0], [0], [0, 0, 1, 0], [], []>} : vector<8x4xbf16>, vector<8x4xbf16>, vector<8x8xf32> -> vector<8x8xf32>
    %cst_54 = arith.constant dense<0xFF800000> : vector<8xf32>
    %101 = vector.multi_reduction <maximumf>, %100, %cst_54 [1] : vector<8x8xf32> to vector<8xf32>
    %102 = vector.shape_cast %101 : vector<8xf32> to vector<8x1xf32>
    %103 = vector.broadcast %102 : vector<8x1xf32> to vector<8x8xf32>
    %104 = arith.subf %100, %103 : vector<8x8xf32>
    %105 = math.exp %104 : vector<8x8xf32>
    %cst_55 = arith.constant dense<0.000000e+00> : vector<8xf32>
    %106 = vector.multi_reduction <add>, %105, %cst_55 [1] : vector<8x8xf32> to vector<8xf32>
    %107 = vector.shape_cast %106 : vector<8xf32> to vector<8x1xf32>
    %108 = tpu.reciprocal %107 {approx = true} : vector<8x1xf32> -> vector<8x1xf32>
    %109 = vector.broadcast %108 : vector<8x1xf32> to vector<8x8xf32>
    %110 = arith.mulf %105, %109 : vector<8x8xf32>
    %111 = arith.truncf %110 : vector<8x8xf32> to vector<8x8xbf16>
    %cst_56 = arith.constant dense<0.000000e+00> : vector<8x4xf32>
    %112 = tpu.matmul %111, %99, %cst_56 {dimension_numbers = #tpu.dot_dimension_numbers<[1], [0], [0], [1], [0, 0, 1, 1], [], []>} : vector<8x8xbf16>, vector<8x4xbf16>, vector<8x4xf32> -> vector<8x4xf32>
    %c0_57 = arith.constant 0 : index
    %c20_58 = arith.constant 20 : index
    %113 = vector.load %arg9[%c0_57, %c20_58] : memref<8x24xf32, #tpu.memory_space<vmem>>, vector<8x4xf32>
    tpu.vector_store %arg9[%c0_57, %c20_58], %112 {strides = array<i32>} : memref<8x24xf32, #tpu.memory_space<vmem>>, vector<8x4xf32>,
    %c0_59 = arith.constant 0 : index
    %c0_60 = arith.constant 0 : index
    %114 = vector.load %arg5[%c0_59, %c0_60] : memref<1x24xf32, #tpu.memory_space<vmem>>, vector<1x24xf32>
    %c0_61 = arith.constant 0 : index
    %c0_62 = arith.constant 0 : index
    %115 = vector.load %arg9[%c0_61, %c0_62] : memref<8x24xf32, #tpu.memory_space<vmem>>, vector<8x24xf32>
    %116 = arith.truncf %115 : vector<8x24xf32> to vector<8x24xbf16>
    %c0_63 = arith.constant 0 : index
    %c0_64 = arith.constant 0 : index
    %117 = vector.load %arg4[%c0_63, %c0_64] : memref<24x24xbf16, #tpu.memory_space<vmem>>, vector<24x24xbf16>
    %cst_65 = arith.constant dense<0.000000e+00> : vector<8x24xf32>
    %118 = tpu.matmul %116, %117, %cst_65 {dimension_numbers = #tpu.dot_dimension_numbers<[1], [0], [0], [1], [0, 0, 1, 1], [], []>} : vector<8x24xbf16>, vector<24x24xbf16>, vector<8x24xf32> -> vector<8x24xf32>
    %119 = vector.broadcast %114 : vector<1x24xf32> to vector<8x24xf32>
    %120 = arith.addf %118, %119 : vector<8x24xf32>
    %c0_66 = arith.constant 0 : index
    %c0_67 = arith.constant 0 : index
    %c0_68 = arith.constant 0 : index
    %121 = vector.load %arg6[%c0_66, %c0_67, %c0_68] : memref<1x8x24xf32, #tpu.memory_space<vmem>>, vector<1x8x24xf32>
    %122 = vector.shape_cast %121 : vector<1x8x24xf32> to vector<8x24xf32>
    %123 = vector.shape_cast %120 : vector<8x24xf32> to vector<1x8x24xf32>
    tpu.vector_store %arg6[%c0_66, %c0_67, %c0_68], %123 {strides = array<i32>} : memref<1x8x24xf32, #tpu.memory_space<vmem>>, vector<1x8x24xf32>,
    return
  }
  func.func @transform_0(%arg0: i32, %arg1: i32) -> (i32, i32, i32) {
    %c0_i32 = arith.constant 0 : i32
    %c0_i32_0 = arith.constant 0 : i32
    %c0_i32_1 = arith.constant 0 : i32
    return %arg0, %c0_i32, %c0_i32_0 : i32, i32, i32
  }
  func.func @transform_1(%arg0: i32, %arg1: i32) -> (i32, i32) {
    %c0_i32 = arith.constant 0 : i32
    %c0_i32_0 = arith.constant 0 : i32
    %c0_i32_1 = arith.constant 0 : i32
    return %c0_i32, %c0_i32_0 : i32, i32
  }
  func.func @transform_2(%arg0: i32, %arg1: i32) -> (i32, i32) {
    %c0_i32 = arith.constant 0 : i32
    %c0_i32_0 = arith.constant 0 : i32
    %c0_i32_1 = arith.constant 0 : i32
    return %c0_i32, %c0_i32_0 : i32, i32
  }
  func.func @transform_3(%arg0: i32, %arg1: i32) -> (i32, i32) {
    %c0_i32 = arith.constant 0 : i32
    %c0_i32_0 = arith.constant 0 : i32
    %c0_i32_1 = arith.constant 0 : i32
    return %c0_i32, %c0_i32_0 : i32, i32
  }
  func.func @transform_4(%arg0: i32, %arg1: i32) -> (i32, i32, i32) {
    %c0_i32 = arith.constant 0 : i32
    %c0_i32_0 = arith.constant 0 : i32
    return %arg0, %arg1, %c0_i32 : i32, i32, i32
  }
}

</mosaic_0001>

<llo_original>
// kernel: tpu_custom_call.1
$region0: #{tpu_custom_call.1}
  #allocation0 [shape = 'u32[]', space=smem, size = 0x4, offset = 0x4, fixed_abs, tag = 'smem constant byte address 0x4 - core index']
  #allocation1 [shape = 'u32[144,128]{1,0:T(1,128)}', space=vmem, size = 0x12000, scoped, tag = 'internal scratch']
  #allocation2 [shape = 'bf16[8,24]{1,0:T(8,128)(2,1)}', space=vmem, size = 0x800, scoped, tag = 'scratch operand']
  #allocation3 [shape = 'bf16[8,24]{1,0:T(8,128)(2,1)}', space=vmem, size = 0x800, scoped, tag = 'scratch operand']
  #allocation4 [shape = 'f32[8,24]{1,0:T(8,128)}', space=vmem, size = 0x1000, scoped, tag = 'scratch operand']
  %s0 = inlined_call_operand.hbm [shape: f32[2,8,24], index: 0, kind: input, shape index: {}]
  %s1 = inlined_call_operand.hbm [shape: bf16[24,72], index: 1, kind: input, shape index: {}]
  %s2 = inlined_call_operand.hbm [shape: bf16[24,24], index: 2, kind: input, shape index: {}]
  %s3 = inlined_call_operand.hbm [shape: f32[1,24], index: 3, kind: input, shape index: {}]
  %s4 = inlined_call_operand.hbm [shape: f32[2,8,24], index: 4, kind: output, shape index: {}]
  %s5 = sld [smem:[#allocation0]]
  $region69: #{tpu_custom_call.1} parent=0
    _
  %s7 = ssub.s32 1, %s5
  %s8 = scalar_select 0, %s7, %s5
  $region1: #{tpu_custom_call.1} parent=0
    #allocation5 [shape = 'u8[8192]{0}', space=vmem, size = 0x2000, scoped, tag = 'input window, operand 0']
    #allocation6 [shape = 's32[2]{0}', space=sflag, size = 0x8, scoped, tag = 'scoped memory for tpu_custom_call.1']
    #allocation7 [shape = 's32[2]{0}', space=sflag, size = 0x8, scoped, tag = 'scoped memory for tpu_custom_call.1']
    #allocation8 [shape = 'u8[6144]{0}', space=vmem, size = 0x1800, scoped, tag = 'input window, operand 1, single buffered']
    #allocation9 [shape = 's32[1]{0}', space=sflag, size = 0x4, scoped, tag = 'scoped memory for tpu_custom_call.1']
    #allocation10 [shape = 'u8[6144]{0}', space=vmem, size = 0x1800, scoped, tag = 'input window, operand 2, single buffered']
    #allocation11 [shape = 'u8[512]{0}', space=vmem, size = 0x400, scoped, tag = 'input window, operand 3, single buffered']
    #allocation12 [shape = 's32[1]{0}', space=sflag, size = 0x4, scoped, tag = 'scoped memory for tpu_custom_call.1']
    #allocation13 [shape = 'u8[8192]{0}', space=vmem, size = 0x2000, scoped, tag = 'output window, operand 0']
    %9 = vsyncpa [#allocation6], 0
    %s10 = scalar_lea.sflag [#allocation6], 1
    %11 = vsyncpa %s10, 0
    %12 = vsyncpa [#allocation9], 0
    %13 = vsyncpa [#allocation12], 0
    %14 = vsyncpa [#allocation7], 0
    %s15 = scalar_lea.sflag [#allocation7], 1
    %16 = vsyncpa %s15, 0
    loop: start=0, step=1, limit=4
    $region2: #{tpu_custom_call.1} parent=1 // loop_pre_header
      _
    $region3: #{tpu_custom_call.1} parent=1 // loop_header
      %s18 = sphi 0, %s22
      %p19 = scmp.ge.s32.totalorder %s18, 4
      %s25 = sphi 0, %s37
      %s26 = sphi 0, %s33
      %s27 = sphi 0, %s25
      %s28 = sphi 0, %s26
      %s29 = sphi 0, %s27
      %s30 = sphi 0, %s28
      %s40 = sphi 0, %s42
      %s43 = sphi 0, %s40
      %s44 = sphi 0, %s43
      %s60 = sphi 0, %s44
      %s64 = sphi 0, %s64
      %s66 = sphi 0, %s64
      %s67 = sphi 0, %s66
      %s81 = sphi 0, %s67
      %s85 = sphi 0, %s85
      %s87 = sphi 0, %s85
      %s88 = sphi 0, %s87
      %s102 = sphi 0, %s88
      %s106 = sphi 0, %s106
      %s108 = sphi 0, %s106
      %s109 = sphi 0, %s108
      %s123 = sphi 0, %s109
      %s131 = sphi 0, %s133
      %s134 = sphi 0, %s131
      %s135 = sphi 0, %s134
      %s151 = sphi 0, %s135
    $region4: #{tpu_custom_call.1} parent=1 // loop_header_branch
      %21 = sbr.rel (%p19) target = $region8
    $region5: #{tpu_custom_call.1} parent=1 // loop_body
      %s23 = ssub.s32 %s18, 1
      %s24 = ssub.s32 %s18, 2
      %s31 = sadd.s32 1, %s26
      %p32 = scmp.ge.s32.totalorder %s31, 1
      %s33 = scalar_select %p32, 0, %s31
      %s34 = sadd.s32 1, %s25
      %s35 = scalar_select %p32, %s34, %s25
      %p36 = scmp.ge.s32.totalorder %s35, 2
      %s37 = scalar_select %p36, 0, %s35
      %s38 = ssub.s32 %s25, %s37
      %p39 = scmp.eq.s32.totalorder %s38, 0
      %s41 = sadd.s32 %s40, 1
      %s42 = scalar_select %p39, %s40, %s41
      %p45 = pneg %p39
      %p46 = scmp.eq.s32.totalorder %s18, 1
      %p47 = por %p45, %p46
      %p48 = scmp.ne.s32.totalorder %s40, %s43
      %p49 = scmp.eq.s32.totalorder %s18, 0
      %p50 = por %p48, %p49
      %p51 = scmp.ne.s32.totalorder %s40, %s43
      %p52 = scmp.eq.s32.totalorder %s23, 1
      %p53 = por %p51, %p52
      %p54 = scmp.ne.s32.totalorder %s43, %s44
      %p55 = scmp.eq.s32.totalorder %s23, 0
      %p56 = por %p54, %p55
      %p57 = scmp.ne.s32.totalorder %s43, %s44
      %p58 = scmp.eq.s32.totalorder %s24, 1
      %p59 = por %p57, %p58
      %p61 = scmp.ne.s32.totalorder %s44, %s60
      %p62 = scmp.eq.s32.totalorder %s24, 0
      %p63 = por %p61, %p62
      %s65 = sadd.s32 %s64, 1
      %p68 = scmp.eq.s32.totalorder %s18, 1
      %p69 = scmp.ne.s32.totalorder %s64, %s66
      %p70 = scmp.eq.s32.totalorder %s18, 0
      %p71 = por %p69, %p70
      %p72 = scmp.ne.s32.totalorder %s64, %s66
      %p73 = scmp.eq.s32.totalorder %s23, 1
      %p74 = por %p72, %p73
      %p75 = scmp.ne.s32.totalorder %s66, %s67
      %p76 = scmp.eq.s32.totalorder %s23, 0
      %p77 = por %p75, %p76
      %p78 = scmp.ne.s32.totalorder %s66, %s67
      %p79 = scmp.eq.s32.totalorder %s24, 1
      %p80 = por %p78, %p79
      %p82 = scmp.ne.s32.totalorder %s67, %s81
      %p83 = scmp.eq.s32.totalorder %s24, 0
      %p84 = por %p82, %p83
      %s86 = sadd.s32 %s85, 1
      %p89 = scmp.eq.s32.totalorder %s18, 1
      %p90 = scmp.ne.s32.totalorder %s85, %s87
      %p91 = scmp.eq.s32.totalorder %s18, 0
      %p92 = por %p90, %p91
      %p93 = scmp.ne.s32.totalorder %s85, %s87
      %p94 = scmp.eq.s32.totalorder %s23, 1
      %p95 = por %p93, %p94
      %p96 = scmp.ne.s32.totalorder %s87, %s88
      %p97 = scmp.eq.s32.totalorder %s23, 0
      %p98 = por %p96, %p97
      %p99 = scmp.ne.s32.totalorder %s87, %s88
      %p100 = scmp.eq.s32.totalorder %s24, 1
      %p101 = por %p99, %p100
      %p103 = scmp.ne.s32.totalorder %s88, %s102
      %p104 = scmp.eq.s32.totalorder %s24, 0
      %p105 = por %p103, %p104
      %s107 = sadd.s32 %s106, 1
      %p110 = scmp.eq.s32.totalorder %s18, 1
      %p111 = scmp.ne.s32.totalorder %s106, %s108
      %p112 = scmp.eq.s32.totalorder %s18, 0
      %p113 = por %p111, %p112
      %p114 = scmp.ne.s32.totalorder %s106, %s108
      %p115 = scmp.eq.s32.totalorder %s23, 1
      %p116 = por %p114, %p115
      %p117 = scmp.ne.s32.totalorder %s108, %s109
      %p118 = scmp.eq.s32.totalorder %s23, 0
      %p119 = por %p117, %p118
      %p120 = scmp.ne.s32.totalorder %s108, %s109
      %p121 = scmp.eq.s32.totalorder %s24, 1
      %p122 = por %p120, %p121
      %p124 = scmp.ne.s32.totalorder %s109, %s123
      %p125 = scmp.eq.s32.totalorder %s24, 0
      %p126 = por %p124, %p125
      %s127 = ssub.s32 %s25, %s37
      %s128 = ssub.s32 %s26, %s33
      %s129 = sor.u32 %s127, %s128
      %p130 = scmp.eq.s32.totalorder %s129, 0
      %s132 = sadd.s32 %s131, 1
      %s133 = scalar_select %p130, %s131, %s132
      %p136 = pneg %p130
      %p137 = scmp.eq.s32.totalorder %s18, 1
      %p138 = por %p136, %p137
      %p139 = scmp.ne.s32.totalorder %s131, %s134
      %p140 = scmp.eq.s32.totalorder %s18, 0
      %p141 = por %p139, %p140
      %p142 = scmp.ne.s32.totalorder %s131, %s134
      %p143 = scmp.eq.s32.totalorder %s23, 1
      %p144 = por %p142, %p143
      %p145 = scmp.ne.s32.totalorder %s134, %s135
      %p146 = scmp.eq.s32.totalorder %s23, 0
      %p147 = por %p145, %p146
      %p148 = scmp.ne.s32.totalorder %s134, %s135
      %p149 = scmp.eq.s32.totalorder %s24, 1
      %p150 = por %p148, %p149
      %p152 = scmp.ne.s32.totalorder %s135, %s151
      %p153 = scmp.eq.s32.totalorder %s24, 0
      %p154 = por %p152, %p153
      %p155 = scmp.le.s32.totalorder 1, %s18
      %p156 = scmp.lt.s32.totalorder %s18, 3
      %p157 = pnand %p155, %p156
      %p158 = pneg %p157
      // Predicated region
      $region9: #{tpu_custom_call.1} parent=5 // pred_check
        _
      $region10: #{tpu_custom_call.1} parent=5 // pred_check_branch
        %160 = sbr.rel (%p157) target = $region12
      $region11: #{tpu_custom_call.1} parent=5 // pred_region
        %s161 = ssub.s32 %s18, 1
        // Predicated region
        $region13: #{tpu_custom_call.1} parent=11 // pred_check
          %p162 = pneg %p77
        $region14: #{tpu_custom_call.1} parent=11 // pred_check_branch
          %164 = sbr.rel (%p162) target = $region16
        $region15: #{tpu_custom_call.1} parent=11 // pred_region
          %s166 = ssub.s32 192, 192
          %167 = vsyncadd [#allocation9], %s166
          %s168 = sshll.u32 [#allocation8], 4
          %s169 = int_to_ptr.vmem [resolvable:$true] %s168
          %174 = dma.hbm_to_vmem [thread:$0]  %s1, 192, %s169, [#allocation9], 64, 64, 4
        $region16: #{tpu_custom_call.1} parent=11 // pred_fallthru
          _
        // Predicated region
        $region17: #{tpu_custom_call.1} parent=11 // pred_check
          %p175 = pneg %p98
        $region18: #{tpu_custom_call.1} parent=11 // pred_check_branch
          %177 = sbr.rel (%p175) target = $region20
        $region19: #{tpu_custom_call.1} parent=11 // pred_region
          %s179 = ssub.s32 192, 192
          %180 = vsyncadd [#allocation9], %s179
          %s181 = sshll.u32 [#allocation10], 4
          %s182 = int_to_ptr.vmem [resolvable:$true] %s181
          %187 = dma.hbm_to_vmem [thread:$0]  %s2, 192, %s182, [#allocation9], 64, 64, 4
        $region20: #{tpu_custom_call.1} parent=11 // pred_fallthru
          _
        // Predicated region
        $region21: #{tpu_custom_call.1} parent=11 // pred_check
          %p188 = pneg %p119
        $region22: #{tpu_custom_call.1} parent=11 // pred_check_branch
          %190 = sbr.rel (%p188) target = $region24
        $region23: #{tpu_custom_call.1} parent=11 // pred_region
          %s192 = ssub.s32 16, 16
          %193 = vsyncadd [#allocation12], %s192
          %s195 = sshll.u32 [#allocation11], 4
          %s196 = int_to_ptr.vmem [resolvable:$true] %s195
          %198 = dma.hbm_to_vmem [thread:$0]  %s3, 16, %s196, [#allocation12]
        $region24: #{tpu_custom_call.1} parent=11 // pred_fallthru
          _
      $region12: #{tpu_custom_call.1} parent=5 // pred_fallthru
        _
      %p199 = scmp.lt.s32.totalorder %s18, 2
      // Predicated region
      $region25: #{tpu_custom_call.1} parent=5 // pred_check
        %p200 = pneg %p199
      $region26: #{tpu_custom_call.1} parent=5 // pred_check_branch
        %202 = sbr.rel (%p200) target = $region28
      $region27: #{tpu_custom_call.1} parent=5 // pred_region
        // Predicated region
        $region29: #{tpu_custom_call.1} parent=27 // pred_check
          %p203 = pneg %p50
        $region30: #{tpu_custom_call.1} parent=27 // pred_check_branch
          %205 = sbr.rel (%p203) target = $region32
        $region31: #{tpu_custom_call.1} parent=27 // pred_region
          %s206 = sand.u32 %s40, 1
          %s207 = scalar_lea.sflag [#allocation6], %s206
          %s208 = sand.u32 %s40, 1
          %s209 = smul.addr %s208, 8
          %s210 = scalar_lea.vmem [#allocation5], %s209
          %s212 = ssub.s32 128, 128
          %213 = vsyncadd %s207, %s212
          %s214 = smul.addr %s25, 128
          %s215 = scalar_lea.hbm %s0, %s214
          %s217 = sshll.u32 %s210, 4
          %s218 = int_to_ptr.vmem [resolvable:$true] %s217
          %220 = dma.hbm_to_vmem [thread:$0]  %s215, 128, %s218, %s207
        $region32: #{tpu_custom_call.1} parent=27 // pred_fallthru
          _
      $region28: #{tpu_custom_call.1} parent=5 // pred_fallthru
        _
      %p221 = scmp.le.s32.totalorder 1, %s18
      %p222 = scmp.lt.s32.totalorder %s18, 3
      %p223 = pnand %p221, %p222
      %p224 = pneg %p223
      // Predicated region
      $region33: #{tpu_custom_call.1} parent=5 // pred_check
        _
      $region34: #{tpu_custom_call.1} parent=5 // pred_check_branch
        %226 = sbr.rel (%p223) target = $region36
      $region35: #{tpu_custom_call.1} parent=5 // pred_region
        %s227 = ssub.s32 %s18, 1
        %s228 = sand.u32 %s43, 1
        %s229 = scalar_lea.sflag [#allocation6], %s228
        %s230 = sand.u32 %s43, 1
        %s231 = smul.addr %s230, 8
        %s232 = scalar_lea.vmem [#allocation5], %s231
        // Predicated region
        $region37: #{tpu_custom_call.1} parent=35 // pred_check
          %p233 = pneg %p56
        $region38: #{tpu_custom_call.1} parent=35 // pred_check_branch
          %235 = sbr.rel (%p233) target = $region40
        $region39: #{tpu_custom_call.1} parent=35 // pred_region
          %236 = dma.done %s229, 128
        $region40: #{tpu_custom_call.1} parent=35 // pred_fallthru
          _
        // Predicated region
        $region41: #{tpu_custom_call.1} parent=35 // pred_check
          %p237 = pneg %p77
        $region42: #{tpu_custom_call.1} parent=35 // pred_check_branch
          %239 = sbr.rel (%p237) target = $region44
        $region43: #{tpu_custom_call.1} parent=35 // pred_region
          %240 = dma.done [#allocation9], 192
        $region44: #{tpu_custom_call.1} parent=35 // pred_fallthru
          _
        // Predicated region
        $region45: #{tpu_custom_call.1} parent=35 // pred_check
          %p241 = pneg %p98
        $region46: #{tpu_custom_call.1} parent=35 // pred_check_branch
          %243 = sbr.rel (%p241) target = $region48
        $region47: #{tpu_custom_call.1} parent=35 // pred_region
          %244 = dma.done [#allocation9], 192
        $region48: #{tpu_custom_call.1} parent=35 // pred_fallthru
          _
        // Predicated region
        $region49: #{tpu_custom_call.1} parent=35 // pred_check
          %p245 = pneg %p119
        $region50: #{tpu_custom_call.1} parent=35 // pred_check_branch
          %247 = sbr.rel (%p245) target = $region52
        $region51: #{tpu_custom_call.1} parent=35 // pred_region
          %248 = dma.done [#allocation12], 16
        $region52: #{tpu_custom_call.1} parent=35 // pred_fallthru
          _
        %s249 = sand.u32 %s43, 1
        %s250 = scalar_lea.sflag [#allocation6], %s249
        %s251 = sand.u32 %s43, 1
        %s252 = smul.addr %s251, 8
        %s253 = scalar_lea.vmem [#allocation5], %s252
        %p254 = pneg %p56
        %p255 = pneg %p53
        %p256 = pneg %p77
        %p257 = pneg %p74
        %p258 = pneg %p98
        %p259 = pneg %p95
        %p260 = pneg %p119
        %p261 = pneg %p116
        %p262 = pneg %p147
        %p263 = pneg %p144
        %s264 = sand.u32 %s134, 1
        %s265 = scalar_lea.sflag [#allocation7], %s264
        %s266 = sand.u32 %s134, 1
        %s267 = smul.addr %s266, 8
        %s268 = scalar_lea.vmem [#allocation13], %s267
        %p270 = scmp.eq.s32.totalorder %s28, 0
        // Predicated region
        $region53: #{tpu_custom_call.1} parent=35 // pred_check
          %p271 = pneg %p270
        $region54: #{tpu_custom_call.1} parent=35 // pred_check_branch
          %273 = sbr.rel (%p271) target = $region56
        $region55: #{tpu_custom_call.1} parent=35 // pred_region
          %v274 = vld [vmem:[%s232] sm:$0xff]
          %v275 = vpack.c.bf16 %v274, %v274
          %v276 = vld [vmem:[#allocation8] sm:$0xf]
          %v277 = vld [vmem:[#allocation8 + $0x4] sm:$0xf]
          %v278 = vld [vmem:[#allocation8 + $0x8] sm:$0xf]
          %v282 = vunpack.c.l.b16 %v276
          %v283 = vunpack.c.l.b16 %v277
          %v284 = vunpack.c.l.b16 %v278
          %v285 = vpack.c.b16 %v283, %v282
          %v286 = vpack.c.b16 %v284, %v284
          %287 = vrot.lane.b32.xlu0 %v285, 104
          %v288 = vpop.permute.xlu0 %287
          %289 = vrot.lane.b32.xlu0 %v286, 104
          %v290 = vpop.permute.xlu0 %289
          %vm292 = vcmask 195584
          %v294 = vsel %vm292, %v275, 0
          %vm296 = vcmask 1043456
          %v298 = vsel %vm296, %v290, 0
          %300 = vmatprep.subr.bf16.mxu0 0
          %301 = vmatpush1.bf16.msra.mxu0 %v288
          %302 = vmatprep.subr.bf16.mxu0 0
          %303 = vmatpush1.bf16.msra.mxu0 %v298
          %304 = vmatprep.subr.bf16.mxu0 0
          %305 = vmatpush1.bf16.msra.mxu0 0
          %306 = vmatprep.subr.bf16.mxu0 0
          %307 = vmatpush1.bf16.msra.mxu0 0
          %308 = vmatprep.subr.bf16.mxu0 0
          %309 = vmatpush1.bf16.msra.mxu0 0
          %310 = vmatprep.subr.bf16.mxu0 0
          %311 = vmatpush1.bf16.msra.mxu0 0
          %312 = vmatprep.subr.bf16.mxu0 0
          %313 = vmatpush1.bf16.msra.mxu0 0
          %314 = vmatprep.subr.bf16.mxu0 0
          %315 = vmatpush1.bf16.msra.mxu0 0
          %316 = vmatprep.subr.bf16.mxu0 0
          %317 = vmatpush1.bf16.msra.mxu0 0
          %318 = vmatprep.subr.bf16.mxu0 0
          %319 = vmatpush1.bf16.msra.mxu0 0
          %320 = vmatprep.subr.bf16.mxu0 0
          %321 = vmatpush1.bf16.msra.mxu0 0
          %322 = vmatprep.subr.bf16.mxu0 0
          %323 = vmatpush1.bf16.msra.mxu0 0
          %324 = vmatprep.subr.bf16.mxu0 0
          %325 = vmatpush1.bf16.msra.mxu0 0
          %326 = vmatprep.subr.bf16.mxu0 0
          %327 = vmatpush1.bf16.msra.mxu0 0
          %328 = vmatprep.subr.bf16.mxu0 0
          %329 = vmatpush1.bf16.msra.mxu0 0
          %330 = vmatprep.subr.bf16.mxu0 0
          %331 = vmatpush1.bf16.msra.mxu0 0
          %332 = vmatprep.mubr.bf16.mxu0 0
          %333 = vmatmul.mubr.bf16.gmra.mrb[0].mxu0 %v294
          %v334 = vpop.f32.mrb[0].mxu0
          %v335 = vadd.f32 0.0, %v334
          %v336 = vpop.f32.mrb[0].mxu0
          %v337 = vpop.f32.mrb[0].mxu0
          %v338 = vpop.f32.mrb[0].mxu0
          %339 = vdwg.mxu0
          %v340 = vpack.c.bf16 %v335, %v335
          %vm341 = vcmask 191488
          %342 = vst.msk [vmem:[#allocation2] sm:$0xf] %vm341, %v340
          %v343 = vld [vmem:[#allocation8] sm:$0xf]
          %v344 = vld [vmem:[#allocation8 + $0x4] sm:$0xf]
          %v345 = vld [vmem:[#allocation8 + $0x8] sm:$0xf]
          %v349 = vunpack.c.l.b16 %v343
          %v350 = vunpack.c.l.b16 %v344
          %v351 = vunpack.c.l.b16 %v345
          %v352 = vpack.c.b16 %v350, %v349
          %v353 = vpack.c.b16 %v351, %v351
          %354 = vrot.lane.b32.xlu0 %v352, 80
          %v355 = vpop.permute.xlu0 %354
          %356 = vrot.lane.b32.xlu0 %v353, 80
          %v357 = vpop.permute.xlu0 %356
          %v360 = vsel %vm296, %v357, 0
          %362 = vmatprep.subr.bf16.mxu0 0
          %363 = vmatpush1.bf16.msra.mxu0 %v355
          %364 = vmatprep.subr.bf16.mxu0 0
          %365 = vmatpush1.bf16.msra.mxu0 %v360
          %366 = vmatprep.subr.bf16.mxu0 0
          %367 = vmatpush1.bf16.msra.mxu0 0
          %368 = vmatprep.subr.bf16.mxu0 0
          %369 = vmatpush1.bf16.msra.mxu0 0
          %370 = vmatprep.subr.bf16.mxu0 0
          %371 = vmatpush1.bf16.msra.mxu0 0
          %372 = vmatprep.subr.bf16.mxu0 0
          %373 = vmatpush1.bf16.msra.mxu0 0
          %374 = vmatprep.subr.bf16.mxu0 0
          %375 = vmatpush1.bf16.msra.mxu0 0
          %376 = vmatprep.subr.bf16.mxu0 0
          %377 = vmatpush1.bf16.msra.mxu0 0
          %378 = vmatprep.subr.bf16.mxu0 0
          %379 = vmatpush1.bf16.msra.mxu0 0
          %380 = vmatprep.subr.bf16.mxu0 0
          %381 = vmatpush1.bf16.msra.mxu0 0
          %382 = vmatprep.subr.bf16.mxu0 0
          %383 = vmatpush1.bf16.msra.mxu0 0
          %384 = vmatprep.subr.bf16.mxu0 0
          %385 = vmatpush1.bf16.msra.mxu0 0
          %386 = vmatprep.subr.bf16.mxu0 0
          %387 = vmatpush1.bf16.msra.mxu0 0
          %388 = vmatprep.subr.bf16.mxu0 0
          %389 = vmatpush1.bf16.msra.mxu0 0
          %390 = vmatprep.subr.bf16.mxu0 0
          %391 = vmatpush1.bf16.msra.mxu0 0
          %392 = vmatprep.subr.bf16.mxu0 0
          %393 = vmatpush1.bf16.msra.mxu0 0
          %394 = vmatprep.mubr.bf16.mxu0 0
          %395 = vmatmul.mubr.bf16.gmra.mrb[0].mxu0 %v294
          %v396 = vpop.f32.mrb[0].mxu0
          %v397 = vadd.f32 0.0, %v396
          %v398 = vpop.f32.mrb[0].mxu0
          %v399 = vpop.f32.mrb[0].mxu0
          %v400 = vpop.f32.mrb[0].mxu0
          %401 = vdwg.mxu0
          %v402 = vpack.c.bf16 %v397, %v397
          %403 = vst.msk [vmem:[#allocation3] sm:$0xf] %vm341, %v402
        $region56: #{tpu_custom_call.1} parent=35 // pred_fallthru
          _
        %s404 = smul.u32 %s28, 8
        %s405 = scalar_lea.vmem %s232, %s404 [#allocation5]
        %v406 = vld [vmem:[%s405] sm:$0xff]
        %v407 = vpack.c.bf16 %v406, %v406
        %v408 = vld [vmem:[#allocation8] sm:$0xf]
        %v409 = vld [vmem:[#allocation8 + $0x4] sm:$0xf]
        %v410 = vld [vmem:[#allocation8 + $0x8] sm:$0xf]
        %v414 = vunpack.c.l.b16 %v408
        %v415 = vunpack.c.l.b16 %v409
        %v416 = vunpack.c.l.b16 %v410
        %v417 = vpack.c.b16 %v415, %v414
        %v418 = vpack.c.b16 %v416, %v416
        %vm420 = vcmask 195584
        %v422 = vsel %vm420, %v407, 0
        %vm424 = vcmask 1043456
        %v426 = vsel %vm424, %v418, 0
        %428 = vmatprep.subr.bf16.mxu0 0
        %429 = vmatpush1.bf16.msra.mxu0 %v417
        %430 = vmatprep.subr.bf16.mxu0 0
        %431 = vmatpush1.bf16.msra.mxu0 %v426
        %432 = vmatprep.subr.bf16.mxu0 0
        %433 = vmatpush1.bf16.msra.mxu0 0
        %434 = vmatprep.subr.bf16.mxu0 0
        %435 = vmatpush1.bf16.msra.mxu0 0
        %436 = vmatprep.subr.bf16.mxu0 0
        %437 = vmatpush1.bf16.msra.mxu0 0
        %438 = vmatprep.subr.bf16.mxu0 0
        %439 = vmatpush1.bf16.msra.mxu0 0
        %440 = vmatprep.subr.bf16.mxu0 0
        %441 = vmatpush1.bf16.msra.mxu0 0
        %442 = vmatprep.subr.bf16.mxu0 0
        %443 = vmatpush1.bf16.msra.mxu0 0
        %444 = vmatprep.subr.bf16.mxu0 0
        %445 = vmatpush1.bf16.msra.mxu0 0
        %446 = vmatprep.subr.bf16.mxu0 0
        %447 = vmatpush1.bf16.msra.mxu0 0
        %448 = vmatprep.subr.bf16.mxu0 0
        %449 = vmatpush1.bf16.msra.mxu0 0
        %450 = vmatprep.subr.bf16.mxu0 0
        %451 = vmatpush1.bf16.msra.mxu0 0
        %452 = vmatprep.subr.bf16.mxu0 0
        %453 = vmatpush1.bf16.msra.mxu0 0
        %454 = vmatprep.subr.bf16.mxu0 0
        %455 = vmatpush1.bf16.msra.mxu0 0
        %456 = vmatprep.subr.bf16.mxu0 0
        %457 = vmatpush1.bf16.msra.mxu0 0
        %458 = vmatprep.subr.bf16.mxu0 0
        %459 = vmatpush1.bf16.msra.mxu0 0
        %460 = vmatprep.mubr.bf16.mxu0 0
        %461 = vmatmul.mubr.bf16.gmra.mrb[0].mxu0 %v422
        %v462 = vpop.f32.mrb[0].mxu0
        %v463 = vadd.f32 0.0, %v462
        %v464 = vpop.f32.mrb[0].mxu0
        %v465 = vpop.f32.mrb[0].mxu0
        %v466 = vpop.f32.mrb[0].mxu0
        %467 = vdwg.mxu0
        %v468 = vpack.c.bf16 %v463, %v463
        %v469 = vld [vmem:[#allocation2] sm:$0xf]
        %v470 = vld [vmem:[#allocation3] sm:$0xf]
        %vm471 = vcmask 31744
        %v473 = vsel %vm471, %v468, 0
        %v476 = vsel %vm471, %v469, 0
        %478 = vmatprep.subr.bf16.mxu0 0
        %479 = vmatpush1.bf16.xpose.msra.mxu0 %v476
        %480 = vmatprep.subr.bf16.mxu0 0
        %481 = vmatpush1.bf16.xpose.msra.mxu0 0
        %482 = vmatprep.subr.bf16.mxu0 0
        %483 = vmatpush1.bf16.xpose.msra.mxu0 0
        %484 = vmatprep.subr.bf16.mxu0 0
        %485 = vmatpush1.bf16.xpose.msra.mxu0 0
        %486 = vmatprep.subr.bf16.mxu0 0
        %487 = vmatpush1.bf16.xpose.msra.mxu0 0
        %488 = vmatprep.subr.bf16.mxu0 0
        %489 = vmatpush1.bf16.xpose.msra.mxu0 0
        %490 = vmatprep.subr.bf16.mxu0 0
        %491 = vmatpush1.bf16.xpose.msra.mxu0 0
        %492 = vmatprep.subr.bf16.mxu0 0
        %493 = vmatpush1.bf16.xpose.msra.mxu0 0
        %494 = vmatprep.subr.bf16.mxu0 0
        %495 = vmatpush1.bf16.xpose.msra.mxu0 0
        %496 = vmatprep.subr.bf16.mxu0 0
        %497 = vmatpush1.bf16.xpose.msra.mxu0 0
        %498 = vmatprep.subr.bf16.mxu0 0
        %499 = vmatpush1.bf16.xpose.msra.mxu0 0
        %500 = vmatprep.subr.bf16.mxu0 0
        %501 = vmatpush1.bf16.xpose.msra.mxu0 0
        %502 = vmatprep.subr.bf16.mxu0 0
        %503 = vmatpush1.bf16.xpose.msra.mxu0 0
        %504 = vmatprep.subr.bf16.mxu0 0
        %505 = vmatpush1.bf16.xpose.msra.mxu0 0
        %506 = vmatprep.subr.bf16.mxu0 0
        %507 = vmatpush1.bf16.xpose.msra.mxu0 0
        %508 = vmatprep.subr.bf16.mxu0 0
        %509 = vmatpush1.bf16.xpose.msra.mxu0 0
        %510 = vmatprep.mubr.bf16.mxu0 0
        %511 = vmatmul.mubr.bf16.gmra.mrb[0].mxu0 %v473
        %v512 = vpop.f32.mrb[0].mxu0
        %v513 = vadd.f32 0.0, %v512
        %v514 = vpop.f32.mrb[0].mxu0
        %v515 = vpop.f32.mrb[0].mxu0
        %v516 = vpop.f32.mrb[0].mxu0
        %517 = vdwg.mxu0
        %vm518 = vcmask 64512
        %v519 = vsel %vm518, %v513, -inf
        %520 = vmax.xlane.f32.xlu0 %v519
        %v521 = vpop.xlane.xlu0 %520
        %v522 = vsub.f32 %v513, %v521
        %v523 = vmul.f32 %v522, 1.442695
        %v524 = vpow.pop %v523
        %v525 = vsel %vm518, %v524, 0.0
        %526 = vadd.xlane.f32.xlu0 %v525
        %v527 = vpop.xlane.xlu0 %526
        %v528 = vrcp.pop %v527
        %v529 = vmul.f32 %v524, %v528
        %v530 = vpack.c.bf16 %v529, %v529
        %v532 = vsel %vm518, %v530, 0
        %v535 = vsel %vm424, %v470, 0
        %537 = vmatprep.subr.bf16.mxu0 0
        %538 = vmatpush1.bf16.msra.mxu0 %v535
        %539 = vmatprep.subr.bf16.mxu0 0
        %540 = vmatpush1.bf16.msra.mxu0 0
        %541 = vmatprep.subr.bf16.mxu0 0
        %542 = vmatpush1.bf16.msra.mxu0 0
        %543 = vmatprep.subr.bf16.mxu0 0
        %544 = vmatpush1.bf16.msra.mxu0 0
        %545 = vmatprep.subr.bf16.mxu0 0
        %546 = vmatpush1.bf16.msra.mxu0 0
        %547 = vmatprep.subr.bf16.mxu0 0
        %548 = vmatpush1.bf16.msra.mxu0 0
        %549 = vmatprep.subr.bf16.mxu0 0
        %550 = vmatpush1.bf16.msra.mxu0 0
        %551 = vmatprep.subr.bf16.mxu0 0
        %552 = vmatpush1.bf16.msra.mxu0 0
        %553 = vmatprep.subr.bf16.mxu0 0
        %554 = vmatpush1.bf16.msra.mxu0 0
        %555 = vmatprep.subr.bf16.mxu0 0
        %556 = vmatpush1.bf16.msra.mxu0 0
        %557 = vmatprep.subr.bf16.mxu0 0
        %558 = vmatpush1.bf16.msra.mxu0 0
        %559 = vmatprep.subr.bf16.mxu0 0
        %560 = vmatpush1.bf16.msra.mxu0 0
        %561 = vmatprep.subr.bf16.mxu0 0
        %562 = vmatpush1.bf16.msra.mxu0 0
        %563 = vmatprep.subr.bf16.mxu0 0
        %564 = vmatpush1.bf16.msra.mxu0 0
        %565 = vmatprep.subr.bf16.mxu0 0
        %566 = vmatpush1.bf16.msra.mxu0 0
        %567 = vmatprep.subr.bf16.mxu0 0
        %568 = vmatpush1.bf16.msra.mxu0 0
        %569 = vmatprep.mubr.bf16.mxu0 0
        %570 = vmatmul.mubr.bf16.gmra.mrb[0].mxu0 %v532
        %v571 = vpop.f32.mrb[0].mxu0
        %v572 = vadd.f32 0.0, %v571
        %v573 = vpop.f32.mrb[0].mxu0
        %v574 = vpop.f32.mrb[0].mxu0
        %v575 = vpop.f32.mrb[0].mxu0
        %576 = vdwg.mxu0
        %577 = vst.msk [vmem:[#allocation4] sm:$0xff] %vm471, %v572
        %v578 = vld [vmem:[#allocation2] sm:$0xf]
        %v579 = vld [vmem:[#allocation3] sm:$0xf]
        %581 = vrot.lane.b32.xlu0 %v468, 124
        %v582 = vpop.permute.xlu0 %581
        %v584 = vunpack.c.l.b16 %v578
        %v585 = vpack.c.b16 %v584, %v584
        %586 = vrot.lane.b32.xlu0 %v585, 124
        %v587 = vpop.permute.xlu0 %586
        %v589 = vsel %vm471, %v582, 0
        %v592 = vsel %vm471, %v587, 0
        %594 = vmatprep.subr.bf16.mxu0 0
        %595 = vmatpush1.bf16.xpose.msra.mxu0 %v592
        %596 = vmatprep.subr.bf16.mxu0 0
        %597 = vmatpush1.bf16.xpose.msra.mxu0 0
        %598 = vmatprep.subr.bf16.mxu0 0
        %599 = vmatpush1.bf16.xpose.msra.mxu0 0
        %600 = vmatprep.subr.bf16.mxu0 0
        %601 = vmatpush1.bf16.xpose.msra.mxu0 0
        %602 = vmatprep.subr.bf16.mxu0 0
        %603 = vmatpush1.bf16.xpose.msra.mxu0 0
        %604 = vmatprep.subr.bf16.mxu0 0
        %605 = vmatpush1.bf16.xpose.msra.mxu0 0
        %606 = vmatprep.subr.bf16.mxu0 0
        %607 = vmatpush1.bf16.xpose.msra.mxu0 0
        %608 = vmatprep.subr.bf16.mxu0 0
        %609 = vmatpush1.bf16.xpose.msra.mxu0 0
        %610 = vmatprep.subr.bf16.mxu0 0
        %611 = vmatpush1.bf16.xpose.msra.mxu0 0
        %612 = vmatprep.subr.bf16.mxu0 0
        %613 = vmatpush1.bf16.xpose.msra.mxu0 0
        %614 = vmatprep.subr.bf16.mxu0 0
        %615 = vmatpush1.bf16.xpose.msra.mxu0 0
        %616 = vmatprep.subr.bf16.mxu0 0
        %617 = vmatpush1.bf16.xpose.msra.mxu0 0
        %618 = vmatprep.subr.bf16.mxu0 0
        %619 = vmatpush1.bf16.xpose.msra.mxu0 0
        %620 = vmatprep.subr.bf16.mxu0 0
        %621 = vmatpush1.bf16.xpose.msra.mxu0 0
        %622 = vmatprep.subr.bf16.mxu0 0
        %623 = vmatpush1.bf16.xpose.msra.mxu0 0
        %624 = vmatprep.subr.bf16.mxu0 0
        %625 = vmatpush1.bf16.xpose.msra.mxu0 0
        %626 = vmatprep.mubr.bf16.mxu0 0
        %627 = vmatmul.mubr.bf16.gmra.mrb[0].mxu0 %v589
        %v628 = vpop.f32.mrb[0].mxu0
        %v629 = vadd.f32 0.0, %v628
        %v630 = vpop.f32.mrb[0].mxu0
        %v631 = vpop.f32.mrb[0].mxu0
        %v632 = vpop.f32.mrb[0].mxu0
        %633 = vdwg.mxu0
        %v634 = vsel %vm518, %v629, -inf
        %635 = vmax.xlane.f32.xlu0 %v634
        %v636 = vpop.xlane.xlu0 %635
        %v637 = vsub.f32 %v629, %v636
        %v638 = vmul.f32 %v637, 1.442695
        %v639 = vpow.pop %v638
        %v640 = vsel %vm518, %v639, 0.0
        %641 = vadd.xlane.f32.xlu0 %v640
        %v642 = vpop.xlane.xlu0 %641
        %v643 = vrcp.pop %v642
        %v644 = vmul.f32 %v639, %v643
        %v645 = vpack.c.bf16 %v644, %v644
        %v647 = vunpack.c.l.b16 %v579
        %v648 = vpack.c.b16 %v647, %v647
        %649 = vrot.lane.b32.xlu0 %v648, 124
        %v650 = vpop.permute.xlu0 %649
        %v652 = vsel %vm518, %v645, 0
        %v655 = vsel %vm424, %v650, 0
        %657 = vmatprep.subr.bf16.mxu0 0
        %658 = vmatpush1.bf16.msra.mxu0 %v655
        %659 = vmatprep.subr.bf16.mxu0 0
        %660 = vmatpush1.bf16.msra.mxu0 0
        %661 = vmatprep.subr.bf16.mxu0 0
        %662 = vmatpush1.bf16.msra.mxu0 0
        %663 = vmatprep.subr.bf16.mxu0 0
        %664 = vmatpush1.bf16.msra.mxu0 0
        %665 = vmatprep.subr.bf16.mxu0 0
        %666 = vmatpush1.bf16.msra.mxu0 0
        %667 = vmatprep.subr.bf16.mxu0 0
        %668 = vmatpush1.bf16.msra.mxu0 0
        %669 = vmatprep.subr.bf16.mxu0 0
        %670 = vmatpush1.bf16.msra.mxu0 0
        %671 = vmatprep.subr.bf16.mxu0 0
        %672 = vmatpush1.bf16.msra.mxu0 0
        %673 = vmatprep.subr.bf16.mxu0 0
        %674 = vmatpush1.bf16.msra.mxu0 0
        %675 = vmatprep.subr.bf16.mxu0 0
        %676 = vmatpush1.bf16.msra.mxu0 0
        %677 = vmatprep.subr.bf16.mxu0 0
        %678 = vmatpush1.bf16.msra.mxu0 0
        %679 = vmatprep.subr.bf16.mxu0 0
        %680 = vmatpush1.bf16.msra.mxu0 0
        %681 = vmatprep.subr.bf16.mxu0 0
        %682 = vmatpush1.bf16.msra.mxu0 0
        %683 = vmatprep.subr.bf16.mxu0 0
        %684 = vmatpush1.bf16.msra.mxu0 0
        %685 = vmatprep.subr.bf16.mxu0 0
        %686 = vmatpush1.bf16.msra.mxu0 0
        %687 = vmatprep.subr.bf16.mxu0 0
        %688 = vmatpush1.bf16.msra.mxu0 0
        %689 = vmatprep.mubr.bf16.mxu0 0
        %690 = vmatmul.mubr.bf16.gmra.mrb[0].mxu0 %v652
        %v691 = vpop.f32.mrb[0].mxu0
        %v692 = vadd.f32 0.0, %v691
        %v693 = vpop.f32.mrb[0].mxu0
        %v694 = vpop.f32.mrb[0].mxu0
        %v695 = vpop.f32.mrb[0].mxu0
        %696 = vdwg.mxu0
        %698 = vrot.lane.b32.xlu0 %v692, 4
        %v699 = vpop.permute.xlu0 %698
        %vm701 = vcmask 64544
        %702 = vst.msk [vmem:[#allocation4] sm:$0xff] %vm701, %v699
        %v703 = vld [vmem:[#allocation2] sm:$0xf]
        %v704 = vld [vmem:[#allocation3] sm:$0xf]
        %705 = vrot.lane.b32.xlu0 %v468, 120
        %v706 = vpop.permute.xlu0 %705
        %v708 = vunpack.c.l.b16 %v703
        %v709 = vpack.c.b16 %v708, %v708
        %710 = vrot.lane.b32.xlu0 %v709, 120
        %v711 = vpop.permute.xlu0 %710
        %v713 = vsel %vm471, %v706, 0
        %v716 = vsel %vm471, %v711, 0
        %718 = vmatprep.subr.bf16.mxu0 0
        %719 = vmatpush1.bf16.xpose.msra.mxu0 %v716
        %720 = vmatprep.subr.bf16.mxu0 0
        %721 = vmatpush1.bf16.xpose.msra.mxu0 0
        %722 = vmatprep.subr.bf16.mxu0 0
        %723 = vmatpush1.bf16.xpose.msra.mxu0 0
        %724 = vmatprep.subr.bf16.mxu0 0
        %725 = vmatpush1.bf16.xpose.msra.mxu0 0
        %726 = vmatprep.subr.bf16.mxu0 0
        %727 = vmatpush1.bf16.xpose.msra.mxu0 0
        %728 = vmatprep.subr.bf16.mxu0 0
        %729 = vmatpush1.bf16.xpose.msra.mxu0 0
        %730 = vmatprep.subr.bf16.mxu0 0
        %731 = vmatpush1.bf16.xpose.msra.mxu0 0
        %732 = vmatprep.subr.bf16.mxu0 0
        %733 = vmatpush1.bf16.xpose.msra.mxu0 0
        %734 = vmatprep.subr.bf16.mxu0 0
        %735 = vmatpush1.bf16.xpose.msra.mxu0 0
        %736 = vmatprep.subr.bf16.mxu0 0
        %737 = vmatpush1.bf16.xpose.msra.mxu0 0
        %738 = vmatprep.subr.bf16.mxu0 0
        %739 = vmatpush1.bf16.xpose.msra.mxu0 0
        %740 = vmatprep.subr.bf16.mxu0 0
        %741 = vmatpush1.bf16.xpose.msra.mxu0 0
        %742 = vmatprep.subr.bf16.mxu0 0
        %743 = vmatpush1.bf16.xpose.msra.mxu0 0
        %744 = vmatprep.subr.bf16.mxu0 0
        %745 = vmatpush1.bf16.xpose.msra.mxu0 0
        %746 = vmatprep.subr.bf16.mxu0 0
        %747 = vmatpush1.bf16.xpose.msra.mxu0 0
        %748 = vmatprep.subr.bf16.mxu0 0
        %749 = vmatpush1.bf16.xpose.msra.mxu0 0
        %750 = vmatprep.mubr.bf16.mxu0 0
        %751 = vmatmul.mubr.bf16.gmra.mrb[0].mxu0 %v713
        %v752 = vpop.f32.mrb[0].mxu0
        %v753 = vadd.f32 0.0, %v752
        %v754 = vpop.f32.mrb[0].mxu0
        %v755 = vpop.f32.mrb[0].mxu0
        %v756 = vpop.f32.mrb[0].mxu0
        %757 = vdwg.mxu0
        %v758 = vsel %vm518, %v753, -inf
        %759 = vmax.xlane.f32.xlu0 %v758
        %v760 = vpop.xlane.xlu0 %759
        %v761 = vsub.f32 %v753, %v760
        %v762 = vmul.f32 %v761, 1.442695
        %v763 = vpow.pop %v762
        %v764 = vsel %vm518, %v763, 0.0
        %765 = vadd.xlane.f32.xlu0 %v764
        %v766 = vpop.xlane.xlu0 %765
        %v767 = vrcp.pop %v766
        %v768 = vmul.f32 %v763, %v767
        %v769 = vpack.c.bf16 %v768, %v768
        %v771 = vunpack.c.l.b16 %v704
        %v772 = vpack.c.b16 %v771, %v771
        %773 = vrot.lane.b32.xlu0 %v772, 120
        %v774 = vpop.permute.xlu0 %773
        %v776 = vsel %vm518, %v769, 0
        %v779 = vsel %vm424, %v774, 0
        %781 = vmatprep.subr.bf16.mxu0 0
        %782 = vmatpush1.bf16.msra.mxu0 %v779
        %783 = vmatprep.subr.bf16.mxu0 0
        %784 = vmatpush1.bf16.msra.mxu0 0
        %785 = vmatprep.subr.bf16.mxu0 0
        %786 = vmatpush1.bf16.msra.mxu0 0
        %787 = vmatprep.subr.bf16.mxu0 0
        %788 = vmatpush1.bf16.msra.mxu0 0
        %789 = vmatprep.subr.bf16.mxu0 0
        %790 = vmatpush1.bf16.msra.mxu0 0
        %791 = vmatprep.subr.bf16.mxu0 0
        %792 = vmatpush1.bf16.msra.mxu0 0
        %793 = vmatprep.subr.bf16.mxu0 0
        %794 = vmatpush1.bf16.msra.mxu0 0
        %795 = vmatprep.subr.bf16.mxu0 0
        %796 = vmatpush1.bf16.msra.mxu0 0
        %797 = vmatprep.subr.bf16.mxu0 0
        %798 = vmatpush1.bf16.msra.mxu0 0
        %799 = vmatprep.subr.bf16.mxu0 0
        %800 = vmatpush1.bf16.msra.mxu0 0
        %801 = vmatprep.subr.bf16.mxu0 0
        %802 = vmatpush1.bf16.msra.mxu0 0
        %803 = vmatprep.subr.bf16.mxu0 0
        %804 = vmatpush1.bf16.msra.mxu0 0
        %805 = vmatprep.subr.bf16.mxu0 0
        %806 = vmatpush1.bf16.msra.mxu0 0
        %807 = vmatprep.subr.bf16.mxu0 0
        %808 = vmatpush1.bf16.msra.mxu0 0
        %809 = vmatprep.subr.bf16.mxu0 0
        %810 = vmatpush1.bf16.msra.mxu0 0
        %811 = vmatprep.subr.bf16.mxu0 0
        %812 = vmatpush1.bf16.msra.mxu0 0
        %813 = vmatprep.mubr.bf16.mxu0 0
        %814 = vmatmul.mubr.bf16.gmra.mrb[0].mxu0 %v776
        %v815 = vpop.f32.mrb[0].mxu0
        %v816 = vadd.f32 0.0, %v815
        %v817 = vpop.f32.mrb[0].mxu0
        %v818 = vpop.f32.mrb[0].mxu0
        %v819 = vpop.f32.mrb[0].mxu0
        %820 = vdwg.mxu0
        %822 = vrot.lane.b32.xlu0 %v816, 8
        %v823 = vpop.permute.xlu0 %822
        %vm825 = vcmask 97344
        %826 = vst.msk [vmem:[#allocation4] sm:$0xff] %vm825, %v823
        %v827 = vld [vmem:[#allocation2] sm:$0xf]
        %v828 = vld [vmem:[#allocation3] sm:$0xf]
        %829 = vrot.lane.b32.xlu0 %v468, 116
        %v830 = vpop.permute.xlu0 %829
        %v832 = vunpack.c.l.b16 %v827
        %v833 = vpack.c.b16 %v832, %v832
        %834 = vrot.lane.b32.xlu0 %v833, 116
        %v835 = vpop.permute.xlu0 %834
        %v837 = vsel %vm471, %v830, 0
        %v840 = vsel %vm471, %v835, 0
        %842 = vmatprep.subr.bf16.mxu0 0
        %843 = vmatpush1.bf16.xpose.msra.mxu0 %v840
        %844 = vmatprep.subr.bf16.mxu0 0
        %845 = vmatpush1.bf16.xpose.msra.mxu0 0
        %846 = vmatprep.subr.bf16.mxu0 0
        %847 = vmatpush1.bf16.xpose.msra.mxu0 0
        %848 = vmatprep.subr.bf16.mxu0 0
        %849 = vmatpush1.bf16.xpose.msra.mxu0 0
        %850 = vmatprep.subr.bf16.mxu0 0
        %851 = vmatpush1.bf16.xpose.msra.mxu0 0
        %852 = vmatprep.subr.bf16.mxu0 0
        %853 = vmatpush1.bf16.xpose.msra.mxu0 0
        %854 = vmatprep.subr.bf16.mxu0 0
        %855 = vmatpush1.bf16.xpose.msra.mxu0 0
        %856 = vmatprep.subr.bf16.mxu0 0
        %857 = vmatpush1.bf16.xpose.msra.mxu0 0
        %858 = vmatprep.subr.bf16.mxu0 0
        %859 = vmatpush1.bf16.xpose.msra.mxu0 0
        %860 = vmatprep.subr.bf16.mxu0 0
        %861 = vmatpush1.bf16.xpose.msra.mxu0 0
        %862 = vmatprep.subr.bf16.mxu0 0
        %863 = vmatpush1.bf16.xpose.msra.mxu0 0
        %864 = vmatprep.subr.bf16.mxu0 0
        %865 = vmatpush1.bf16.xpose.msra.mxu0 0
        %866 = vmatprep.subr.bf16.mxu0 0
        %867 = vmatpush1.bf16.xpose.msra.mxu0 0
        %868 = vmatprep.subr.bf16.mxu0 0
        %869 = vmatpush1.bf16.xpose.msra.mxu0 0
        %870 = vmatprep.subr.bf16.mxu0 0
        %871 = vmatpush1.bf16.xpose.msra.mxu0 0
        %872 = vmatprep.subr.bf16.mxu0 0
        %873 = vmatpush1.bf16.xpose.msra.mxu0 0
        %874 = vmatprep.mubr.bf16.mxu0 0
        %875 = vmatmul.mubr.bf16.gmra.mrb[0].mxu0 %v837
        %v876 = vpop.f32.mrb[0].mxu0
        %v877 = vadd.f32 0.0, %v876
        %v878 = vpop.f32.mrb[0].mxu0
        %v879 = vpop.f32.mrb[0].mxu0
        %v880 = vpop.f32.mrb[0].mxu0
        %881 = vdwg.mxu0
        %v882 = vsel %vm518, %v877, -inf
        %883 = vmax.xlane.f32.xlu0 %v882
        %v884 = vpop.xlane.xlu0 %883
        %v885 = vsub.f32 %v877, %v884
        %v886 = vmul.f32 %v885, 1.442695
        %v887 = vpow.pop %v886
        %v888 = vsel %vm518, %v887, 0.0
        %889 = vadd.xlane.f32.xlu0 %v888
        %v890 = vpop.xlane.xlu0 %889
        %v891 = vrcp.pop %v890
        %v892 = vmul.f32 %v887, %v891
        %v893 = vpack.c.bf16 %v892, %v892
        %v895 = vunpack.c.l.b16 %v828
        %v896 = vpack.c.b16 %v895, %v895
        %897 = vrot.lane.b32.xlu0 %v896, 116
        %v898 = vpop.permute.xlu0 %897
        %v900 = vsel %vm518, %v893, 0
        %v903 = vsel %vm424, %v898, 0
        %905 = vmatprep.subr.bf16.mxu0 0
        %906 = vmatpush1.bf16.msra.mxu0 %v903
        %907 = vmatprep.subr.bf16.mxu0 0
        %908 = vmatpush1.bf16.msra.mxu0 0
        %909 = vmatprep.subr.bf16.mxu0 0
        %910 = vmatpush1.bf16.msra.mxu0 0
        %911 = vmatprep.subr.bf16.mxu0 0
        %912 = vmatpush1.bf16.msra.mxu0 0
        %913 = vmatprep.subr.bf16.mxu0 0
        %914 = vmatpush1.bf16.msra.mxu0 0
        %915 = vmatprep.subr.bf16.mxu0 0
        %916 = vmatpush1.bf16.msra.mxu0 0
        %917 = vmatprep.subr.bf16.mxu0 0
        %918 = vmatpush1.bf16.msra.mxu0 0
        %919 = vmatprep.subr.bf16.mxu0 0
        %920 = vmatpush1.bf16.msra.mxu0 0
        %921 = vmatprep.subr.bf16.mxu0 0
        %922 = vmatpush1.bf16.msra.mxu0 0
        %923 = vmatprep.subr.bf16.mxu0 0
        %924 = vmatpush1.bf16.msra.mxu0 0
        %925 = vmatprep.subr.bf16.mxu0 0
        %926 = vmatpush1.bf16.msra.mxu0 0
        %927 = vmatprep.subr.bf16.mxu0 0
        %928 = vmatpush1.bf16.msra.mxu0 0
        %929 = vmatprep.subr.bf16.mxu0 0
        %930 = vmatpush1.bf16.msra.mxu0 0
        %931 = vmatprep.subr.bf16.mxu0 0
        %932 = vmatpush1.bf16.msra.mxu0 0
        %933 = vmatprep.subr.bf16.mxu0 0
        %934 = vmatpush1.bf16.msra.mxu0 0
        %935 = vmatprep.subr.bf16.mxu0 0
        %936 = vmatpush1.bf16.msra.mxu0 0
        %937 = vmatprep.mubr.bf16.mxu0 0
        %938 = vmatmul.mubr.bf16.gmra.mrb[0].mxu0 %v900
        %v939 = vpop.f32.mrb[0].mxu0
        %v940 = vadd.f32 0.0, %v939
        %v941 = vpop.f32.mrb[0].mxu0
        %v942 = vpop.f32.mrb[0].mxu0
        %v943 = vpop.f32.mrb[0].mxu0
        %944 = vdwg.mxu0
        %946 = vrot.lane.b32.xlu0 %v940, 12
        %v947 = vpop.permute.xlu0 %946
        %vm949 = vcmask 130144
        %950 = vst.msk [vmem:[#allocation4] sm:$0xff] %vm949, %v947
        %v951 = vld [vmem:[#allocation2] sm:$0xf]
        %v952 = vld [vmem:[#allocation3] sm:$0xf]
        %953 = vrot.lane.b32.xlu0 %v468, 112
        %v954 = vpop.permute.xlu0 %953
        %v956 = vunpack.c.l.b16 %v951
        %v957 = vpack.c.b16 %v956, %v956
        %958 = vrot.lane.b32.xlu0 %v957, 112
        %v959 = vpop.permute.xlu0 %958
        %v961 = vsel %vm471, %v954, 0
        %v964 = vsel %vm471, %v959, 0
        %966 = vmatprep.subr.bf16.mxu0 0
        %967 = vmatpush1.bf16.xpose.msra.mxu0 %v964
        %968 = vmatprep.subr.bf16.mxu0 0
        %969 = vmatpush1.bf16.xpose.msra.mxu0 0
        %970 = vmatprep.subr.bf16.mxu0 0
        %971 = vmatpush1.bf16.xpose.msra.mxu0 0
        %972 = vmatprep.subr.bf16.mxu0 0
        %973 = vmatpush1.bf16.xpose.msra.mxu0 0
        %974 = vmatprep.subr.bf16.mxu0 0
        %975 = vmatpush1.bf16.xpose.msra.mxu0 0
        %976 = vmatprep.subr.bf16.mxu0 0
        %977 = vmatpush1.bf16.xpose.msra.mxu0 0
        %978 = vmatprep.subr.bf16.mxu0 0
        %979 = vmatpush1.bf16.xpose.msra.mxu0 0
        %980 = vmatprep.subr.bf16.mxu0 0
        %981 = vmatpush1.bf16.xpose.msra.mxu0 0
        %982 = vmatprep.subr.bf16.mxu0 0
        %983 = vmatpush1.bf16.xpose.msra.mxu0 0
        %984 = vmatprep.subr.bf16.mxu0 0
        %985 = vmatpush1.bf16.xpose.msra.mxu0 0
        %986 = vmatprep.subr.bf16.mxu0 0
        %987 = vmatpush1.bf16.xpose.msra.mxu0 0
        %988 = vmatprep.subr.bf16.mxu0 0
        %989 = vmatpush1.bf16.xpose.msra.mxu0 0
        %990 = vmatprep.subr.bf16.mxu0 0
        %991 = vmatpush1.bf16.xpose.msra.mxu0 0
        %992 = vmatprep.subr.bf16.mxu0 0
        %993 = vmatpush1.bf16.xpose.msra.mxu0 0
        %994 = vmatprep.subr.bf16.mxu0 0
        %995 = vmatpush1.bf16.xpose.msra.mxu0 0
        %996 = vmatprep.subr.bf16.mxu0 0
        %997 = vmatpush1.bf16.xpose.msra.mxu0 0
        %998 = vmatprep.mubr.bf16.mxu0 0
        %999 = vmatmul.mubr.bf16.gmra.mrb[0].mxu0 %v961
        %v1000 = vpop.f32.mrb[0].mxu0
        %v1001 = vadd.f32 0.0, %v1000
        %v1002 = vpop.f32.mrb[0].mxu0
        %v1003 = vpop.f32.mrb[0].mxu0
        %v1004 = vpop.f32.mrb[0].mxu0
        %1005 = vdwg.mxu0
        %v1006 = vsel %vm518, %v1001, -inf
        %1007 = vmax.xlane.f32.xlu0 %v1006
        %v1008 = vpop.xlane.xlu0 %1007
        %v1009 = vsub.f32 %v1001, %v1008
        %v1010 = vmul.f32 %v1009, 1.442695
        %v1011 = vpow.pop %v1010
        %v1012 = vsel %vm518, %v1011, 0.0
        %1013 = vadd.xlane.f32.xlu0 %v1012
        %v1014 = vpop.xlane.xlu0 %1013
        %v1015 = vrcp.pop %v1014
        %v1016 = vmul.f32 %v1011, %v1015
        %v1017 = vpack.c.bf16 %v1016, %v1016
        %v1019 = vunpack.c.l.b16 %v952
        %v1020 = vpack.c.b16 %v1019, %v1019
        %1021 = vrot.lane.b32.xlu0 %v1020, 112
        %v1022 = vpop.permute.xlu0 %1021
        %v1024 = vsel %vm518, %v1017, 0
        %v1027 = vsel %vm424, %v1022, 0
        %1029 = vmatprep.subr.bf16.mxu0 0
        %1030 = vmatpush1.bf16.msra.mxu0 %v1027
        %1031 = vmatprep.subr.bf16.mxu0 0
        %1032 = vmatpush1.bf16.msra.mxu0 0
        %1033 = vmatprep.subr.bf16.mxu0 0
        %1034 = vmatpush1.bf16.msra.mxu0 0
        %1035 = vmatprep.subr.bf16.mxu0 0
        %1036 = vmatpush1.bf16.msra.mxu0 0
        %1037 = vmatprep.subr.bf16.mxu0 0
        %1038 = vmatpush1.bf16.msra.mxu0 0
        %1039 = vmatprep.subr.bf16.mxu0 0
        %1040 = vmatpush1.bf16.msra.mxu0 0
        %1041 = vmatprep.subr.bf16.mxu0 0
        %1042 = vmatpush1.bf16.msra.mxu0 0
        %1043 = vmatprep.subr.bf16.mxu0 0
        %1044 = vmatpush1.bf16.msra.mxu0 0
        %1045 = vmatprep.subr.bf16.mxu0 0
        %1046 = vmatpush1.bf16.msra.mxu0 0
        %1047 = vmatprep.subr.bf16.mxu0 0
        %1048 = vmatpush1.bf16.msra.mxu0 0
        %1049 = vmatprep.subr.bf16.mxu0 0
        %1050 = vmatpush1.bf16.msra.mxu0 0
        %1051 = vmatprep.subr.bf16.mxu0 0
        %1052 = vmatpush1.bf16.msra.mxu0 0
        %1053 = vmatprep.subr.bf16.mxu0 0
        %1054 = vmatpush1.bf16.msra.mxu0 0
        %1055 = vmatprep.subr.bf16.mxu0 0
        %1056 = vmatpush1.bf16.msra.mxu0 0
        %1057 = vmatprep.subr.bf16.mxu0 0
        %1058 = vmatpush1.bf16.msra.mxu0 0
        %1059 = vmatprep.subr.bf16.mxu0 0
        %1060 = vmatpush1.bf16.msra.mxu0 0
        %1061 = vmatprep.mubr.bf16.mxu0 0
        %1062 = vmatmul.mubr.bf16.gmra.mrb[0].mxu0 %v1024
        %v1063 = vpop.f32.mrb[0].mxu0
        %v1064 = vadd.f32 0.0, %v1063
        %v1065 = vpop.f32.mrb[0].mxu0
        %v1066 = vpop.f32.mrb[0].mxu0
        %v1067 = vpop.f32.mrb[0].mxu0
        %1068 = vdwg.mxu0
        %1070 = vrot.lane.b32.xlu0 %v1064, 16
        %v1071 = vpop.permute.xlu0 %1070
        %vm1073 = vcmask 162944
        %1074 = vst.msk [vmem:[#allocation4] sm:$0xff] %vm1073, %v1071
        %v1075 = vld [vmem:[#allocation2] sm:$0xf]
        %v1076 = vld [vmem:[#allocation3] sm:$0xf]
        %1077 = vrot.lane.b32.xlu0 %v468, 108
        %v1078 = vpop.permute.xlu0 %1077
        %v1080 = vunpack.c.l.b16 %v1075
        %v1081 = vpack.c.b16 %v1080, %v1080
        %1082 = vrot.lane.b32.xlu0 %v1081, 108
        %v1083 = vpop.permute.xlu0 %1082
        %v1085 = vsel %vm471, %v1078, 0
        %v1088 = vsel %vm471, %v1083, 0
        %1090 = vmatprep.subr.bf16.mxu0 0
        %1091 = vmatpush1.bf16.xpose.msra.mxu0 %v1088
        %1092 = vmatprep.subr.bf16.mxu0 0
        %1093 = vmatpush1.bf16.xpose.msra.mxu0 0
        %1094 = vmatprep.subr.bf16.mxu0 0
        %1095 = vmatpush1.bf16.xpose.msra.mxu0 0
        %1096 = vmatprep.subr.bf16.mxu0 0
        %1097 = vmatpush1.bf16.xpose.msra.mxu0 0
        %1098 = vmatprep.subr.bf16.mxu0 0
        %1099 = vmatpush1.bf16.xpose.msra.mxu0 0
        %1100 = vmatprep.subr.bf16.mxu0 0
        %1101 = vmatpush1.bf16.xpose.msra.mxu0 0
        %1102 = vmatprep.subr.bf16.mxu0 0
        %1103 = vmatpush1.bf16.xpose.msra.mxu0 0
        %1104 = vmatprep.subr.bf16.mxu0 0
        %1105 = vmatpush1.bf16.xpose.msra.mxu0 0
        %1106 = vmatprep.subr.bf16.mxu0 0
        %1107 = vmatpush1.bf16.xpose.msra.mxu0 0
        %1108 = vmatprep.subr.bf16.mxu0 0
        %1109 = vmatpush1.bf16.xpose.msra.mxu0 0
        %1110 = vmatprep.subr.bf16.mxu0 0
        %1111 = vmatpush1.bf16.xpose.msra.mxu0 0
        %1112 = vmatprep.subr.bf16.mxu0 0
        %1113 = vmatpush1.bf16.xpose.msra.mxu0 0
        %1114 = vmatprep.subr.bf16.mxu0 0
        %1115 = vmatpush1.bf16.xpose.msra.mxu0 0
        %1116 = vmatprep.subr.bf16.mxu0 0
        %1117 = vmatpush1.bf16.xpose.msra.mxu0 0
        %1118 = vmatprep.subr.bf16.mxu0 0
        %1119 = vmatpush1.bf16.xpose.msra.mxu0 0
        %1120 = vmatprep.subr.bf16.mxu0 0
        %1121 = vmatpush1.bf16.xpose.msra.mxu0 0
        %1122 = vmatprep.mubr.bf16.mxu0 0
        %1123 = vmatmul.mubr.bf16.gmra.mrb[0].mxu0 %v1085
        %v1124 = vpop.f32.mrb[0].mxu0
        %v1125 = vadd.f32 0.0, %v1124
        %v1126 = vpop.f32.mrb[0].mxu0
        %v1127 = vpop.f32.mrb[0].mxu0
        %v1128 = vpop.f32.mrb[0].mxu0
        %1129 = vdwg.mxu0
        %v1130 = vsel %vm518, %v1125, -inf
        %1131 = vmax.xlane.f32.xlu0 %v1130
        %v1132 = vpop.xlane.xlu0 %1131
        %v1133 = vsub.f32 %v1125, %v1132
        %v1134 = vmul.f32 %v1133, 1.442695
        %v1135 = vpow.pop %v1134
        %v1136 = vsel %vm518, %v1135, 0.0
        %1137 = vadd.xlane.f32.xlu0 %v1136
        %v1138 = vpop.xlane.xlu0 %1137
        %v1139 = vrcp.pop %v1138
        %v1140 = vmul.f32 %v1135, %v1139
        %v1141 = vpack.c.bf16 %v1140, %v1140
        %v1143 = vunpack.c.l.b16 %v1076
        %v1144 = vpack.c.b16 %v1143, %v1143
        %1145 = vrot.lane.b32.xlu0 %v1144, 108
        %v1146 = vpop.permute.xlu0 %1145
        %v1148 = vsel %vm518, %v1141, 0
        %v1151 = vsel %vm424, %v1146, 0
        %1153 = vmatprep.subr.bf16.mxu0 0
        %1154 = vmatpush1.bf16.msra.mxu0 %v1151
        %1155 = vmatprep.subr.bf16.mxu0 0
        %1156 = vmatpush1.bf16.msra.mxu0 0
        %1157 = vmatprep.subr.bf16.mxu0 0
        %1158 = vmatpush1.bf16.msra.mxu0 0
        %1159 = vmatprep.subr.bf16.mxu0 0
        %1160 = vmatpush1.bf16.msra.mxu0 0
        %1161 = vmatprep.subr.bf16.mxu0 0
        %1162 = vmatpush1.bf16.msra.mxu0 0
        %1163 = vmatprep.subr.bf16.mxu0 0
        %1164 = vmatpush1.bf16.msra.mxu0 0
        %1165 = vmatprep.subr.bf16.mxu0 0
        %1166 = vmatpush1.bf16.msra.mxu0 0
        %1167 = vmatprep.subr.bf16.mxu0 0
        %1168 = vmatpush1.bf16.msra.mxu0 0
        %1169 = vmatprep.subr.bf16.mxu0 0
        %1170 = vmatpush1.bf16.msra.mxu0 0
        %1171 = vmatprep.subr.bf16.mxu0 0
        %1172 = vmatpush1.bf16.msra.mxu0 0
        %1173 = vmatprep.subr.bf16.mxu0 0
        %1174 = vmatpush1.bf16.msra.mxu0 0
        %1175 = vmatprep.subr.bf16.mxu0 0
        %1176 = vmatpush1.bf16.msra.mxu0 0
        %1177 = vmatprep.subr.bf16.mxu0 0
        %1178 = vmatpush1.bf16.msra.mxu0 0
        %1179 = vmatprep.subr.bf16.mxu0 0
        %1180 = vmatpush1.bf16.msra.mxu0 0
        %1181 = vmatprep.subr.bf16.mxu0 0
        %1182 = vmatpush1.bf16.msra.mxu0 0
        %1183 = vmatprep.subr.bf16.mxu0 0
        %1184 = vmatpush1.bf16.msra.mxu0 0
        %1185 = vmatprep.mubr.bf16.mxu0 0
        %1186 = vmatmul.mubr.bf16.gmra.mrb[0].mxu0 %v1148
        %v1187 = vpop.f32.mrb[0].mxu0
        %v1188 = vadd.f32 0.0, %v1187
        %v1189 = vpop.f32.mrb[0].mxu0
        %v1190 = vpop.f32.mrb[0].mxu0
        %v1191 = vpop.f32.mrb[0].mxu0
        %1192 = vdwg.mxu0
        %1194 = vrot.lane.b32.xlu0 %v1188, 20
        %v1195 = vpop.permute.xlu0 %1194
        %vm1197 = vcmask 195744
        %1198 = vst.msk [vmem:[#allocation4] sm:$0xff] %vm1197, %v1195
        %v1199 = vld [vmem:[#allocation11] sm:$0x1]
        %v1200 = vld [vmem:[#allocation4] sm:$0xff]
        %v1201 = vpack.c.bf16 %v1200, %v1200
        %v1202 = vld [vmem:[#allocation10] sm:$0xf]
        %v1203 = vld [vmem:[#allocation10 + $0x4] sm:$0xf]
        %v1204 = vld [vmem:[#allocation10 + $0x8] sm:$0xf]
        %v1206 = vlaneseq
        %v1207 = vshrl.u32 %v1206, 7
        %v1208 = vsub.s32 0, %v1207
        %v1209 = vrot.slane %v1199, %v1208
        %v1214 = vunpack.c.l.b16 %v1202
        %v1215 = vunpack.c.l.b16 %v1203
        %v1216 = vunpack.c.l.b16 %v1204
        %v1217 = vpack.c.b16 %v1215, %v1214
        %v1218 = vpack.c.b16 %v1216, %v1216
        %v1221 = vsel %vm420, %v1201, 0
        %v1224 = vsel %vm424, %v1218, 0
        %1226 = vmatprep.subr.bf16.mxu0 0
        %1227 = vmatpush1.bf16.msra.mxu0 %v1217
        %1228 = vmatprep.subr.bf16.mxu0 0
        %1229 = vmatpush1.bf16.msra.mxu0 %v1224
        %1230 = vmatprep.subr.bf16.mxu0 0
        %1231 = vmatpush1.bf16.msra.mxu0 0
        %1232 = vmatprep.subr.bf16.mxu0 0
        %1233 = vmatpush1.bf16.msra.mxu0 0
        %1234 = vmatprep.subr.bf16.mxu0 0
        %1235 = vmatpush1.bf16.msra.mxu0 0
        %1236 = vmatprep.subr.bf16.mxu0 0
        %1237 = vmatpush1.bf16.msra.mxu0 0
        %1238 = vmatprep.subr.bf16.mxu0 0
        %1239 = vmatpush1.bf16.msra.mxu0 0
        %1240 = vmatprep.subr.bf16.mxu0 0
        %1241 = vmatpush1.bf16.msra.mxu0 0
        %1242 = vmatprep.subr.bf16.mxu0 0
        %1243 = vmatpush1.bf16.msra.mxu0 0
        %1244 = vmatprep.subr.bf16.mxu0 0
        %1245 = vmatpush1.bf16.msra.mxu0 0
        %1246 = vmatprep.subr.bf16.mxu0 0
        %1247 = vmatpush1.bf16.msra.mxu0 0
        %1248 = vmatprep.subr.bf16.mxu0 0
        %1249 = vmatpush1.bf16.msra.mxu0 0
        %1250 = vmatprep.subr.bf16.mxu0 0
        %1251 = vmatpush1.bf16.msra.mxu0 0
        %1252 = vmatprep.subr.bf16.mxu0 0
        %1253 = vmatpush1.bf16.msra.mxu0 0
        %1254 = vmatprep.subr.bf16.mxu0 0
        %1255 = vmatpush1.bf16.msra.mxu0 0
        %1256 = vmatprep.subr.bf16.mxu0 0
        %1257 = vmatpush1.bf16.msra.mxu0 0
        %1258 = vmatprep.mubr.bf16.mxu0 0
        %1259 = vmatmul.mubr.bf16.gmra.mrb[0].mxu0 %v1221
        %v1260 = vpop.f32.mrb[0].mxu0
        %v1261 = vadd.f32 %v1209, %v1260
        %v1262 = vpop.f32.mrb[0].mxu0
        %v1263 = vpop.f32.mrb[0].mxu0
        %v1264 = vpop.f32.mrb[0].mxu0
        %1265 = vdwg.mxu0
        %1266 = vst.msk [vmem:[%s268] sm:$0xff] %vm420, %v1261
        %s1267 = sand.u32 %s134, 1
        %s1268 = scalar_lea.sflag [#allocation7], %s1267
        %s1269 = sand.u32 %s134, 1
        %s1270 = smul.addr %s1269, 8
        %s1271 = scalar_lea.vmem [#allocation13], %s1270
        // Predicated region
        $region57: #{tpu_custom_call.1} parent=35 // pred_check
          %p1272 = pneg %p144
        $region58: #{tpu_custom_call.1} parent=35 // pred_check_branch
          %1274 = sbr.rel (%p1272) target = $region60
        $region59: #{tpu_custom_call.1} parent=35 // pred_region
          %s1276 = ssub.s32 128, 128
          %1277 = vsyncadd %s1268, %s1276
          %s1278 = sadd.s32 %s28, %s27
          %s1279 = smul.addr %s1278, 128
          %s1280 = scalar_lea.hbm %s4, %s1279
          %s1282 = sshll.u32 %s1271, 4
          %s1283 = int_to_ptr.vmem [resolvable:$true] %s1282
          %1285 = dma.vmem_to_hbm [thread:$0]  %s1283, 128, %s1280, %s1268
        $region60: #{tpu_custom_call.1} parent=35 // pred_fallthru
          _
      $region36: #{tpu_custom_call.1} parent=5 // pred_fallthru
        _
      %p1286 = scmp.le.s32.totalorder 2, %s18
      // Predicated region
      $region61: #{tpu_custom_call.1} parent=5 // pred_check
        %p1287 = pneg %p1286
      $region62: #{tpu_custom_call.1} parent=5 // pred_check_branch
        %1289 = sbr.rel (%p1287) target = $region64
      $region63: #{tpu_custom_call.1} parent=5 // pred_region
        %s1290 = ssub.s32 %s18, 2
        // Predicated region
        $region65: #{tpu_custom_call.1} parent=63 // pred_check
          %p1291 = pneg %p150
        $region66: #{tpu_custom_call.1} parent=63 // pred_check_branch
          %1293 = sbr.rel (%p1291) target = $region68
        $region67: #{tpu_custom_call.1} parent=63 // pred_region
          %s1294 = sand.u32 %s135, 1
          %s1295 = scalar_lea.sflag [#allocation7], %s1294
          %s1296 = sand.u32 %s135, 1
          %s1297 = smul.addr %s1296, 8
          %s1298 = scalar_lea.vmem [#allocation13], %s1297
          %1299 = dma.done %s1295, 128
        $region68: #{tpu_custom_call.1} parent=63 // pred_fallthru
          _
      $region64: #{tpu_custom_call.1} parent=5 // pred_fallthru
        _
    $region6: #{tpu_custom_call.1} parent=1 // loop_footer
      %s22 = sadd.s32 1, %s18
    $region7: #{tpu_custom_call.1} parent=1 // loop_footer_branch
      %17 = sbr.rel target = $region3
    $region8: #{tpu_custom_call.1} parent=1 // loop_exit
      _
    %1300 = vsyncpa [#allocation6], 1
    %s1301 = scalar_lea.sflag [#allocation6], 1
    %1302 = vsyncpa %s1301, 1
    %1303 = vsyncpa [#allocation9], 1
    %1304 = vsyncpa [#allocation12], 1
    %1305 = vsyncpa [#allocation7], 1
    %s1306 = scalar_lea.sflag [#allocation7], 1
    %1307 = vsyncpa %s1306, 1

</llo_original>
